<compile_context>
chip_gen: v5e
topology: v5e:2x2
jax: 0.10.0
libtpu: 0.0.40
codegen_flags: <defaults>
</compile_context>

<pallas_src>
import jax
import jax.numpy as jnp
from jax import lax
from jax.experimental import pallas as pl
from jax.experimental.pallas import tpu as pltpu

LANE = 128


# ----------------------------- Pallas kernel -------------------------------

def _block_kernel(p_ref, w_ref, b_ref, g_ref, o_ref):
    # conv-as-matmul on the MXU: bf16 operands, f32 accumulation.
    y = jnp.dot(p_ref[...], w_ref[...], preferred_element_type=jnp.float32)
    y = y + b_ref[...]                                     # (tm, Cp) f32
    # RMSNorm over channels: F.normalize(y, dim=C) * g * sqrt(C).
    # Padded channels have zero weight/bias, so they add 0 to the sum of squares.
    sumsq = jnp.sum(y * y, axis=-1, keepdims=True)         # (tm, 1)
    inv = lax.rsqrt(jnp.maximum(sumsq, 1e-24))             # == 1 / max(||y||_2, 1e-12)
    yn = y * inv * g_ref[...]                              # sqrt(Cout) already folded into g
    # SiLU
    o_ref[...] = yn * (1.0 / (1.0 + jnp.exp(-yn)))


# --------------------------- pallas_call wrapper ----------------------------

def _fused_block_call(patches, w, b, g, *, tm):
    M, K = patches.shape            # M already padded to a multiple of tm
    Cp = w.shape[1]
    cost = pl.CostEstimate(
        flops=2 * M * K * Cp + 8 * M * Cp,
        transcendentals=M * Cp + M,
        bytes_accessed=M * K * 2 + K * Cp * 2 + 2 * Cp * 4 + M * Cp * 4,
    )
    return pl.pallas_call(
        _block_kernel,
        out_shape=jax.ShapeDtypeStruct((M, Cp), jnp.float32),
        grid=(M // tm,),
        in_specs=[
            pl.BlockSpec((tm, K), lambda i: (i, 0)),
            pl.BlockSpec((K, Cp), lambda i: (0, 0)),
            pl.BlockSpec((1, Cp), lambda i: (0, 0)),
            pl.BlockSpec((1, Cp), lambda i: (0, 0)),
        ],
        out_specs=pl.BlockSpec((tm, Cp), lambda i: (i, 0)),
        compiler_params=pltpu.CompilerParams(
            dimension_semantics=("parallel",),
            vmem_limit_bytes=32 * 1024 * 1024,
        ),
        cost_estimate=cost,
    )(patches, w, b, g)


# ------------------------------ JAX glue ------------------------------------

def _im2col_3x3(x_nhwc):
    """3x3 padded patches: [B*H*W, 9*C] with (kh, kw, c) ordering (bf16 in, bf16 out)."""
    B, H, W, C = x_nhwc.shape
    xp = jnp.pad(x_nhwc, ((0, 0), (1, 1), (1, 1), (0, 0)))
    pats = jnp.stack(
        [xp[:, kh:kh + H, kw:kw + W, :] for kh in range(3) for kw in range(3)], axis=3)
    return pats.reshape(B * H * W, 9 * C)


def _flatten_conv3_weight(w_oihw):
    """[Cout, Cin, 3, 3] -> [9*Cin, Cout] matching im2col (kh, kw, c) ordering."""
    cout = w_oihw.shape[0]
    return jnp.transpose(w_oihw, (2, 3, 1, 0)).reshape(-1, cout)


def _pad_lanes(a, cp):
    return jnp.pad(a, ((0, 0), (0, cp - a.shape[-1])))


def _pick_tm(M, *, target=512, vmem_budget_bytes=8 * 1024 * 1024, k=36, cp=128):
    """Row-tile: fit double-buffered patch+output tiles in a small VMEM budget,
    keep >= 2 grid steps when M allows (v7x has 2 TensorCores), multiple of 8."""
    bytes_per_row = 2 * (k * 2) + 2 * (cp * 4)
    tm = min(target, max(8, vmem_budget_bytes // max(1, bytes_per_row)))
    if M > 8 and tm > (M + 1) // 2:
        tm = max(8, (M + 1) // 2)
    return max(8, (tm // 8) * 8)


def block_forward(x_nchw, params, *, tm_target=512):
    """Forward of Block. Input/output NCHW (PyTorch layout)."""
    w, b, g = params["w"], params["b"], params["g"]
    cout = w.shape[0]
    B, _, H, W = x_nchw.shape

    x = jnp.transpose(x_nchw, (0, 2, 3, 1))                       # NHWC
    patches = _im2col_3x3(x.astype(jnp.bfloat16))                 # (M, 9*Cin) bf16
    M, K = patches.shape

    cp = pl.cdiv(cout, LANE) * LANE                               # lane-dense padded Cout
    tm = _pick_tm(M, target=tm_target, k=K, cp=cp)
    mp = pl.cdiv(M, tm) * tm
    if mp != M:                                                   # zero tail rows, sliced off below
        patches = jnp.pad(patches, ((0, mp - M), (0, 0)))

    w_flat = _pad_lanes(_flatten_conv3_weight(w), cp).astype(jnp.bfloat16)        # (K, cp)
    b_pad = _pad_lanes(b.reshape(1, -1), cp).astype(jnp.float32)                  # (1, cp)
    # fold the static RMSNorm scale sqrt(true Cout) into g (padding stays zero)
    g_pad = _pad_lanes(g.reshape(1, -1) * (float(cout) ** 0.5), cp).astype(jnp.float32)

    out = _fused_block_call(patches, w_flat, b_pad, g_pad, tm=tm)  # (mp, cp) f32
    out = out[:M, :cout].reshape(B, H, W, cout)
    return jnp.transpose(out, (0, 3, 1, 2))                        # back to NCHW


# ------------------------------ pure-JAX reference ---------------------------

def _ref_forward(x_nchw, params, matmul_dtype=jnp.float32):
    """Module-faithful reference. matmul_dtype=bfloat16 mimics the kernel's MXU quantization."""
    w = params["w"].astype(matmul_dtype).astype(jnp.float32)
    x = x_nchw.astype(matmul_dtype).astype(jnp.float32)
    y = lax.conv_general_dilated(
        x, w, (1, 1), [(1, 1), (1, 1)],
        dimension_numbers=("NCHW", "OIHW", "NCHW"))
    y = y + params["b"].reshape(1, -1, 1, 1)
    norm = jnp.sqrt(jnp.sum(y * y, axis=1, keepdims=True))
    yn = y / jnp.maximum(norm, 1e-12) * params["g"].reshape(1, -1, 1, 1) * (w.shape[0] ** 0.5)
    return yn * (1.0 / (1.0 + jnp.exp(-yn)))


# ------------------------------ main -----------------------------------------

if __name__ == "__main__":
    B, DIM, DIM_OUT, H, W = 2, 4, 8, 16, 16

    key = jax.random.PRNGKey(0)
    ks = jax.random.split(key, 4)
    params = {
        "w": 0.1 * jax.random.normal(ks[0], (DIM_OUT, DIM, 3, 3), jnp.float32),
        "b": 0.1 * jax.random.normal(ks[1], (DIM_OUT,), jnp.float32),
        "g": jnp.ones((DIM_OUT,), jnp.float32),   # RMSNorm.g initialized to ones
    }
    # Dropout(p=0.0) is identity in forward, so it is omitted.
    x = jax.random.normal(ks[2], (B, DIM, H, W), jnp.float32)

    out = jax.block_until_ready(block_forward(x, params))
    assert out.shape == (B, DIM_OUT, H, W)

    # tight check vs a reference with the same bf16 MXU-operand quantization
    ref_q = _ref_forward(x, params, matmul_dtype=jnp.bfloat16)
    assert jnp.allclose(out, ref_q, rtol=1e-3, atol=1e-3), "mismatch vs bf16-operand reference"
    # loose check vs exact f32 module semantics (slack only for bf16 operand quantization)
    ref_f = _ref_forward(x, params, matmul_dtype=jnp.float32)
    assert jnp.allclose(out, ref_f, rtol=5e-2, atol=5e-2), "mismatch vs f32 reference"

    print("KERNEL_OK")
</pallas_src>

<mosaic_0001>
module attributes {stable_mosaic.version = 11 : i64} {
  func.func @_block_kernel(%arg0: i32, %arg1: memref<256x36xbf16, #tpu.memory_space<vmem>>, %arg2: memref<36x128xbf16, #tpu.memory_space<vmem>>, %arg3: memref<1x128xf32, #tpu.memory_space<vmem>>, %arg4: memref<1x128xf32, #tpu.memory_space<vmem>>, %arg5: memref<256x128xf32, #tpu.memory_space<vmem>>) attributes {dimension_semantics = [#tpu.dimension_semantics<parallel>], iteration_bounds = array<i64: 2>, scalar_prefetch = 0 : i64, scratch_operands = 0 : i64, tpu.core_type = #tpu.core_type<tc>, window_params = [{transform_indices = @transform_0, window_bounds = array<i64: 256, 36>}, {pipeline_mode = #tpu.pipeline_mode<synchronous>, transform_indices = @transform_1, window_bounds = array<i64: 36, 128>}, {pipeline_mode = #tpu.pipeline_mode<synchronous>, transform_indices = @transform_2, window_bounds = array<i64: 1, 128>}, {pipeline_mode = #tpu.pipeline_mode<synchronous>, transform_indices = @transform_3, window_bounds = array<i64: 1, 128>}, {transform_indices = @transform_4, window_bounds = array<i64: 256, 128>}]} {
    %c0 = arith.constant 0 : index
    %c0_0 = arith.constant 0 : index
    %0 = vector.load %arg1[%c0, %c0_0] : memref<256x36xbf16, #tpu.memory_space<vmem>>, vector<256x36xbf16>
    %c0_1 = arith.constant 0 : index
    %c0_2 = arith.constant 0 : index
    %1 = vector.load %arg2[%c0_1, %c0_2] : memref<36x128xbf16, #tpu.memory_space<vmem>>, vector<36x128xbf16>
    %cst = arith.constant dense<0.000000e+00> : vector<256x128xf32>
    %2 = tpu.matmul %0, %1, %cst {dimension_numbers = #tpu.dot_dimension_numbers<[1], [0], [0], [1], [0, 0, 1, 1], [], []>} : vector<256x36xbf16>, vector<36x128xbf16>, vector<256x128xf32> -> vector<256x128xf32>
    %c0_3 = arith.constant 0 : index
    %c0_4 = arith.constant 0 : index
    %3 = vector.load %arg3[%c0_3, %c0_4] : memref<1x128xf32, #tpu.memory_space<vmem>>, vector<1x128xf32>
    %4 = vector.broadcast %3 : vector<1x128xf32> to vector<256x128xf32>
    %5 = arith.addf %2, %4 : vector<256x128xf32>
    %6 = arith.mulf %5, %5 : vector<256x128xf32>
    %cst_5 = arith.constant dense<0.000000e+00> : vector<256xf32>
    %7 = vector.multi_reduction <add>, %6, %cst_5 [1] : vector<256x128xf32> to vector<256xf32>
    %8 = vector.shape_cast %7 : vector<256xf32> to vector<256x1xf32>
    %cst_6 = arith.constant 1.000000e-24 : f32
    %9 = vector.broadcast %cst_6 : f32 to vector<256x1xf32>
    %10 = arith.maximumf %8, %9 : vector<256x1xf32>
    %11 = math.rsqrt %10 : vector<256x1xf32>
    %12 = vector.broadcast %11 : vector<256x1xf32> to vector<256x128xf32>
    %13 = arith.mulf %5, %12 : vector<256x128xf32>
    %c0_7 = arith.constant 0 : index
    %c0_8 = arith.constant 0 : index
    %14 = vector.load %arg4[%c0_7, %c0_8] : memref<1x128xf32, #tpu.memory_space<vmem>>, vector<1x128xf32>
    %15 = vector.broadcast %14 : vector<1x128xf32> to vector<256x128xf32>
    %16 = arith.mulf %13, %15 : vector<256x128xf32>
    %cst_9 = arith.constant 0.000000e+00 : f32
    %17 = vector.broadcast %cst_9 : f32 to vector<256x128xf32>
    %18 = arith.subf %17, %16 : vector<256x128xf32>
    %19 = math.exp %18 : vector<256x128xf32>
    %cst_10 = arith.constant 1.000000e+00 : f32
    %20 = vector.broadcast %cst_10 : f32 to vector<256x128xf32>
    %21 = arith.addf %20, %19 : vector<256x128xf32>
    %cst_11 = arith.constant 1.000000e+00 : f32
    %22 = vector.broadcast %cst_11 : f32 to vector<256x128xf32>
    %23 = arith.divf %22, %21 : vector<256x128xf32>
    %24 = arith.mulf %16, %23 : vector<256x128xf32>
    %c0_12 = arith.constant 0 : index
    %c0_13 = arith.constant 0 : index
    %25 = vector.load %arg5[%c0_12, %c0_13] : memref<256x128xf32, #tpu.memory_space<vmem>>, vector<256x128xf32>
    tpu.vector_store %arg5[%c0_12, %c0_13], %24 {strides = array<i32>} : memref<256x128xf32, #tpu.memory_space<vmem>>, vector<256x128xf32>,
    return
  }
  func.func @transform_0(%arg0: i32) -> (i32, i32) {
    %c0_i32 = arith.constant 0 : i32
    %c0_i32_0 = arith.constant 0 : i32
    return %arg0, %c0_i32 : i32, i32
  }
  func.func @transform_1(%arg0: i32) -> (i32, i32) {
    %c0_i32 = arith.constant 0 : i32
    %c0_i32_0 = arith.constant 0 : i32
    %c0_i32_1 = arith.constant 0 : i32
    return %c0_i32, %c0_i32_0 : i32, i32
  }
  func.func @transform_2(%arg0: i32) -> (i32, i32) {
    %c0_i32 = arith.constant 0 : i32
    %c0_i32_0 = arith.constant 0 : i32
    %c0_i32_1 = arith.constant 0 : i32
    return %c0_i32, %c0_i32_0 : i32, i32
  }
  func.func @transform_3(%arg0: i32) -> (i32, i32) {
    %c0_i32 = arith.constant 0 : i32
    %c0_i32_0 = arith.constant 0 : i32
    %c0_i32_1 = arith.constant 0 : i32
    return %c0_i32, %c0_i32_0 : i32, i32
  }
  func.func @transform_4(%arg0: i32) -> (i32, i32) {
    %c0_i32 = arith.constant 0 : i32
    %c0_i32_0 = arith.constant 0 : i32
    return %arg0, %c0_i32 : i32, i32
  }
}

</mosaic_0001>

<llo_original>
// kernel: tpu_custom_call.1
$region0: #{tpu_custom_call.1}
  #allocation0 [shape = 'u32[]', space=smem, size = 0x4, offset = 0x4, fixed_abs, tag = 'smem constant byte address 0x4 - core index']
  #allocation1 [shape = 'u32[72,128]{1,0:T(1,128)}', space=vmem, size = 0x9000, scoped, tag = 'internal scratch']
  %s0 = inlined_call_operand.vmem [shape: bf16[512,36], index: 0, kind: input, shape index: {}]
  %s1 = inlined_call_operand.vmem [shape: bf16[36,128], index: 1, kind: input, shape index: {}]
  %s2 = inlined_call_operand.vmem [shape: f32[1,128], index: 2, kind: input, shape index: {}]
  %s3 = inlined_call_operand.vmem [shape: f32[1,128], index: 3, kind: input, shape index: {}]
  %s4 = inlined_call_operand.hbm [shape: f32[512,128], index: 4, kind: output, shape index: {}]
  %s5 = sld [smem:[#allocation0]]
  $region49: #{tpu_custom_call.1} parent=0
    _
  %s7 = ssub.s32 1, %s5
  %s8 = scalar_select 0, %s7, %s5
  $region1: #{tpu_custom_call.1} parent=0
    #allocation2 [shape = 'u8[262144]{0}', space=vmem, size = 0x40000, scoped, tag = 'output window, operand 0']
    #allocation3 [shape = 's32[2]{0}', space=sflag, size = 0x8, scoped, tag = 'scoped memory for tpu_custom_call.1']
    %9 = vsyncpa [#allocation3], 0
    %s10 = scalar_lea.sflag [#allocation3], 1
    %11 = vsyncpa %s10, 0
    loop: start=0, step=1, limit=4
    $region2: #{tpu_custom_call.1} parent=1 // loop_pre_header
      _
    $region3: #{tpu_custom_call.1} parent=1 // loop_header
      %s13 = sphi 0, %s17
      %p14 = scmp.ge.s32.totalorder %s13, 4
      %s23 = sphi 0, %s25
      %s26 = sphi 0, %s23
      %s27 = sphi 0, %s26
      %s43 = sphi 0, %s27
      %s47 = sphi 0, %s47
      %s49 = sphi 0, %s47
      %s50 = sphi 0, %s49
      %s64 = sphi 0, %s50
      %s68 = sphi 0, %s68
      %s70 = sphi 0, %s68
      %s71 = sphi 0, %s70
      %s85 = sphi 0, %s71
      %s89 = sphi 0, %s89
      %s91 = sphi 0, %s89
      %s92 = sphi 0, %s91
      %s106 = sphi 0, %s92
      %s112 = sphi 0, %s114
      %s115 = sphi 0, %s112
      %s116 = sphi 0, %s115
      %s132 = sphi 0, %s116
    $region4: #{tpu_custom_call.1} parent=1 // loop_header_branch
      %16 = sbr.rel (%p14) target = $region8
    $region5: #{tpu_custom_call.1} parent=1 // loop_body
      %s18 = ssub.s32 %s13, 1
      %s19 = ssub.s32 %s13, 2
      %s20 = sadd.s32 %s13, 1
      %s21 = ssub.s32 %s13, %s20
      %p22 = scmp.eq.s32.totalorder %s21, 0
      %s24 = sadd.s32 %s23, 1
      %s25 = scalar_select %p22, %s23, %s24
      %p28 = pneg %p22
      %p29 = scmp.eq.s32.totalorder %s13, 1
      %p30 = por %p28, %p29
      %p31 = scmp.ne.s32.totalorder %s23, %s26
      %p32 = scmp.eq.s32.totalorder %s13, 0
      %p33 = por %p31, %p32
      %p34 = scmp.ne.s32.totalorder %s23, %s26
      %p35 = scmp.eq.s32.totalorder %s18, 1
      %p36 = por %p34, %p35
      %p37 = scmp.ne.s32.totalorder %s26, %s27
      %p38 = scmp.eq.s32.totalorder %s18, 0
      %p39 = por %p37, %p38
      %p40 = scmp.ne.s32.totalorder %s26, %s27
      %p41 = scmp.eq.s32.totalorder %s19, 1
      %p42 = por %p40, %p41
      %p44 = scmp.ne.s32.totalorder %s27, %s43
      %p45 = scmp.eq.s32.totalorder %s19, 0
      %p46 = por %p44, %p45
      %s48 = sadd.s32 %s47, 1
      %p51 = scmp.eq.s32.totalorder %s13, 1
      %p52 = scmp.ne.s32.totalorder %s47, %s49
      %p53 = scmp.eq.s32.totalorder %s13, 0
      %p54 = por %p52, %p53
      %p55 = scmp.ne.s32.totalorder %s47, %s49
      %p56 = scmp.eq.s32.totalorder %s18, 1
      %p57 = por %p55, %p56
      %p58 = scmp.ne.s32.totalorder %s49, %s50
      %p59 = scmp.eq.s32.totalorder %s18, 0
      %p60 = por %p58, %p59
      %p61 = scmp.ne.s32.totalorder %s49, %s50
      %p62 = scmp.eq.s32.totalorder %s19, 1
      %p63 = por %p61, %p62
      %p65 = scmp.ne.s32.totalorder %s50, %s64
      %p66 = scmp.eq.s32.totalorder %s19, 0
      %p67 = por %p65, %p66
      %s69 = sadd.s32 %s68, 1
      %p72 = scmp.eq.s32.totalorder %s13, 1
      %p73 = scmp.ne.s32.totalorder %s68, %s70
      %p74 = scmp.eq.s32.totalorder %s13, 0
      %p75 = por %p73, %p74
      %p76 = scmp.ne.s32.totalorder %s68, %s70
      %p77 = scmp.eq.s32.totalorder %s18, 1
      %p78 = por %p76, %p77
      %p79 = scmp.ne.s32.totalorder %s70, %s71
      %p80 = scmp.eq.s32.totalorder %s18, 0
      %p81 = por %p79, %p80
      %p82 = scmp.ne.s32.totalorder %s70, %s71
      %p83 = scmp.eq.s32.totalorder %s19, 1
      %p84 = por %p82, %p83
      %p86 = scmp.ne.s32.totalorder %s71, %s85
      %p87 = scmp.eq.s32.totalorder %s19, 0
      %p88 = por %p86, %p87
      %s90 = sadd.s32 %s89, 1
      %p93 = scmp.eq.s32.totalorder %s13, 1
      %p94 = scmp.ne.s32.totalorder %s89, %s91
      %p95 = scmp.eq.s32.totalorder %s13, 0
      %p96 = por %p94, %p95
      %p97 = scmp.ne.s32.totalorder %s89, %s91
      %p98 = scmp.eq.s32.totalorder %s18, 1
      %p99 = por %p97, %p98
      %p100 = scmp.ne.s32.totalorder %s91, %s92
      %p101 = scmp.eq.s32.totalorder %s18, 0
      %p102 = por %p100, %p101
      %p103 = scmp.ne.s32.totalorder %s91, %s92
      %p104 = scmp.eq.s32.totalorder %s19, 1
      %p105 = por %p103, %p104
      %p107 = scmp.ne.s32.totalorder %s92, %s106
      %p108 = scmp.eq.s32.totalorder %s19, 0
      %p109 = por %p107, %p108
      %s110 = ssub.s32 %s13, %s20
      %p111 = scmp.eq.s32.totalorder %s110, 0
      %s113 = sadd.s32 %s112, 1
      %s114 = scalar_select %p111, %s112, %s113
      %p117 = pneg %p111
      %p118 = scmp.eq.s32.totalorder %s13, 1
      %p119 = por %p117, %p118
      %p120 = scmp.ne.s32.totalorder %s112, %s115
      %p121 = scmp.eq.s32.totalorder %s13, 0
      %p122 = por %p120, %p121
      %p123 = scmp.ne.s32.totalorder %s112, %s115
      %p124 = scmp.eq.s32.totalorder %s18, 1
      %p125 = por %p123, %p124
      %p126 = scmp.ne.s32.totalorder %s115, %s116
      %p127 = scmp.eq.s32.totalorder %s18, 0
      %p128 = por %p126, %p127
      %p129 = scmp.ne.s32.totalorder %s115, %s116
      %p130 = scmp.eq.s32.totalorder %s19, 1
      %p131 = por %p129, %p130
      %p133 = scmp.ne.s32.totalorder %s116, %s132
      %p134 = scmp.eq.s32.totalorder %s19, 0
      %p135 = por %p133, %p134
      %p136 = scmp.le.s32.totalorder 1, %s13
      %p137 = scmp.lt.s32.totalorder %s13, 3
      %p138 = pnand %p136, %p137
      %p139 = pneg %p138
      // Predicated region
      $region9: #{tpu_custom_call.1} parent=5 // pred_check
        _
      $region10: #{tpu_custom_call.1} parent=5 // pred_check_branch
        %141 = sbr.rel (%p138) target = $region12
      $region11: #{tpu_custom_call.1} parent=5 // pred_region
        %s142 = ssub.s32 %s13, 1
        // Predicated region
        $region13: #{tpu_custom_call.1} parent=11 // pred_check
          %p143 = pneg %p60
        $region14: #{tpu_custom_call.1} parent=11 // pred_check_branch
          %145 = sbr.rel (%p143) target = $region16
        $region15: #{tpu_custom_call.1} parent=11 // pred_region
          _
        $region16: #{tpu_custom_call.1} parent=11 // pred_fallthru
          _
        // Predicated region
        $region17: #{tpu_custom_call.1} parent=11 // pred_check
          %p146 = pneg %p81
        $region18: #{tpu_custom_call.1} parent=11 // pred_check_branch
          %148 = sbr.rel (%p146) target = $region20
        $region19: #{tpu_custom_call.1} parent=11 // pred_region
          _
        $region20: #{tpu_custom_call.1} parent=11 // pred_fallthru
          _
        // Predicated region
        $region21: #{tpu_custom_call.1} parent=11 // pred_check
          %p149 = pneg %p102
        $region22: #{tpu_custom_call.1} parent=11 // pred_check_branch
          %151 = sbr.rel (%p149) target = $region24
        $region23: #{tpu_custom_call.1} parent=11 // pred_region
          _
        $region24: #{tpu_custom_call.1} parent=11 // pred_fallthru
          _
      $region12: #{tpu_custom_call.1} parent=5 // pred_fallthru
        _
      %p152 = scmp.lt.s32.totalorder %s13, 2
      // Predicated region
      $region25: #{tpu_custom_call.1} parent=5 // pred_check
        %p153 = pneg %p152
      $region26: #{tpu_custom_call.1} parent=5 // pred_check_branch
        %155 = sbr.rel (%p153) target = $region28
      $region27: #{tpu_custom_call.1} parent=5 // pred_region
        // Predicated region
        $region29: #{tpu_custom_call.1} parent=27 // pred_check
          %p156 = pneg %p33
        $region30: #{tpu_custom_call.1} parent=27 // pred_check_branch
          %158 = sbr.rel (%p156) target = $region32
        $region31: #{tpu_custom_call.1} parent=27 // pred_region
          %s159 = smul.u32 32, %s13
          %p160 = scmp.lt.s32.totalorder %s159, 63
          %s161 = scalar_select %p160, %s159, 63
          %s162 = smul.addr %s161, 4
          %s163 = scalar_lea.vmem %s0, %s162
          %s164 = smul.u32 32, %s13
        $region32: #{tpu_custom_call.1} parent=27 // pred_fallthru
          _
      $region28: #{tpu_custom_call.1} parent=5 // pred_fallthru
        _
      %p165 = scmp.le.s32.totalorder 1, %s13
      %p166 = scmp.lt.s32.totalorder %s13, 3
      %p167 = pnand %p165, %p166
      %p168 = pneg %p167
      // Predicated region
      $region33: #{tpu_custom_call.1} parent=5 // pred_check
        _
      $region34: #{tpu_custom_call.1} parent=5 // pred_check_branch
        %170 = sbr.rel (%p167) target = $region36
      $region35: #{tpu_custom_call.1} parent=5 // pred_region
        %s171 = ssub.s32 %s13, 1
        %s172 = smul.u32 32, %s18
        %p173 = scmp.lt.s32.totalorder %s172, 63
        %s174 = scalar_select %p173, %s172, 63
        %s175 = smul.addr %s174, 4
        %s176 = scalar_lea.vmem %s0, %s175
        %p177 = pneg %p39
        %p178 = pneg %p36
        %p179 = pneg %p60
        %p180 = pneg %p57
        %p181 = pneg %p81
        %p182 = pneg %p78
        %p183 = pneg %p102
        %p184 = pneg %p99
        %p185 = pneg %p128
        %p186 = pneg %p125
        %s187 = sand.u32 %s115, 1
        %s188 = scalar_lea.sflag [#allocation3], %s187
        %s189 = sand.u32 %s115, 1
        %s190 = smul.addr %s189, 256
        %s191 = scalar_lea.vmem [#allocation2], %s190
        %s192 = smul.u32 32, %s18
        %p193 = scmp.lt.s32.totalorder %s192, 63
        %s194 = scalar_select %p193, %s192, 63
        %s195 = smul.addr %s194, 4
        %s196 = scalar_lea.vmem %s0, %s195
        %s197 = smul.u32 32, %s18
        %s198 = smul.u32 32, %s18
        %v200 = vld [vmem:[%s196] sm:$0xf]
        %v201 = vld [vmem:[%s196 + $0x4] sm:$0xf]
        %v202 = vld [vmem:[%s196 + $0x8] sm:$0xf]
        %v203 = vld [vmem:[%s196 + $0xc] sm:$0xf]
        %v204 = vld [vmem:[%s196 + $0x10] sm:$0xf]
        %v205 = vld [vmem:[%s196 + $0x14] sm:$0xf]
        %v206 = vld [vmem:[%s196 + $0x18] sm:$0xf]
        %v207 = vld [vmem:[%s196 + $0x1c] sm:$0xf]
        %v208 = vld [vmem:[%s196 + $0x20] sm:$0xf]
        %v209 = vld [vmem:[%s196 + $0x24] sm:$0xf]
        %v210 = vld [vmem:[%s196 + $0x28] sm:$0xf]
        %v211 = vld [vmem:[%s196 + $0x2c] sm:$0xf]
        %v212 = vld [vmem:[%s196 + $0x30] sm:$0xf]
        %v213 = vld [vmem:[%s196 + $0x34] sm:$0xf]
        %v214 = vld [vmem:[%s196 + $0x38] sm:$0xf]
        %v215 = vld [vmem:[%s196 + $0x3c] sm:$0xf]
        %v216 = vld [vmem:[%s196 + $0x40] sm:$0xf]
        %v217 = vld [vmem:[%s196 + $0x44] sm:$0xf]
        %v218 = vld [vmem:[%s196 + $0x48] sm:$0xf]
        %v219 = vld [vmem:[%s196 + $0x4c] sm:$0xf]
        %v220 = vld [vmem:[%s196 + $0x50] sm:$0xf]
        %v221 = vld [vmem:[%s196 + $0x54] sm:$0xf]
        %v222 = vld [vmem:[%s196 + $0x58] sm:$0xf]
        %v223 = vld [vmem:[%s196 + $0x5c] sm:$0xf]
        %v224 = vld [vmem:[%s196 + $0x60] sm:$0xf]
        %v225 = vld [vmem:[%s196 + $0x64] sm:$0xf]
        %v226 = vld [vmem:[%s196 + $0x68] sm:$0xf]
        %v227 = vld [vmem:[%s196 + $0x6c] sm:$0xf]
        %v228 = vld [vmem:[%s196 + $0x70] sm:$0xf]
        %v229 = vld [vmem:[%s196 + $0x74] sm:$0xf]
        %v230 = vld [vmem:[%s196 + $0x78] sm:$0xf]
        %v231 = vld [vmem:[%s196 + $0x7c] sm:$0xf]
        %v232 = vld [vmem:[%s1] sm:$0xf]
        %v233 = vld [vmem:[%s1 + $0x4] sm:$0xf]
        %v234 = vld [vmem:[%s1 + $0x8] sm:$0xf]
        %v235 = vld [vmem:[%s1 + $0xc] sm:$0xf]
        %v236 = vld [vmem:[%s1 + $0x10] sm:$0x3]
        %v237 = vld [vmem:[%s2] sm:$0x1]
        %v239 = vperm.slane %v237, 0
        %v273 = vunpack.c.l.b16 %v200
        %v274 = vunpack.c.l.b16 %v201
        %v275 = vunpack.c.l.b16 %v202
        %v276 = vunpack.c.l.b16 %v203
        %v277 = vunpack.c.l.b16 %v204
        %v278 = vunpack.c.l.b16 %v205
        %v279 = vunpack.c.l.b16 %v206
        %v280 = vunpack.c.l.b16 %v207
        %v281 = vunpack.c.l.b16 %v208
        %v282 = vunpack.c.l.b16 %v209
        %v283 = vunpack.c.l.b16 %v210
        %v284 = vunpack.c.l.b16 %v211
        %v285 = vunpack.c.l.b16 %v212
        %v286 = vunpack.c.l.b16 %v213
        %v287 = vunpack.c.l.b16 %v214
        %v288 = vunpack.c.l.b16 %v215
        %v289 = vunpack.c.l.b16 %v216
        %v290 = vunpack.c.l.b16 %v217
        %v291 = vunpack.c.l.b16 %v218
        %v292 = vunpack.c.l.b16 %v219
        %v293 = vunpack.c.l.b16 %v220
        %v294 = vunpack.c.l.b16 %v221
        %v295 = vunpack.c.l.b16 %v222
        %v296 = vunpack.c.l.b16 %v223
        %v297 = vunpack.c.l.b16 %v224
        %v298 = vunpack.c.l.b16 %v225
        %v299 = vunpack.c.l.b16 %v226
        %v300 = vunpack.c.l.b16 %v227
        %v301 = vunpack.c.l.b16 %v228
        %v302 = vunpack.c.l.b16 %v229
        %v303 = vunpack.c.l.b16 %v230
        %v304 = vunpack.c.l.b16 %v231
        %v305 = vpack.c.b16 %v274, %v273
        %v306 = vpack.c.b16 %v276, %v275
        %v307 = vpack.c.b16 %v278, %v277
        %v308 = vpack.c.b16 %v280, %v279
        %v309 = vpack.c.b16 %v282, %v281
        %v310 = vpack.c.b16 %v284, %v283
        %v311 = vpack.c.b16 %v286, %v285
        %v312 = vpack.c.b16 %v288, %v287
        %v313 = vpack.c.b16 %v290, %v289
        %v314 = vpack.c.b16 %v292, %v291
        %v315 = vpack.c.b16 %v294, %v293
        %v316 = vpack.c.b16 %v296, %v295
        %v317 = vpack.c.b16 %v298, %v297
        %v318 = vpack.c.b16 %v300, %v299
        %v319 = vpack.c.b16 %v302, %v301
        %v320 = vpack.c.b16 %v304, %v303
        %v326 = vunpack.c.l.b16 %v232
        %v327 = vunpack.c.l.b16 %v233
        %v328 = vunpack.c.l.b16 %v234
        %v329 = vunpack.c.l.b16 %v235
        %v330 = vunpack.c.l.b16 %v236
        %v331 = vpack.c.b16 %v327, %v326
        %v332 = vpack.c.b16 %v329, %v328
        %v333 = vpack.c.b16 %v330, %v330
        %vm336 = vcmask 293888
        %v338 = vsel %vm336, %v305, 0
        %v341 = vsel %vm336, %v306, 0
        %v344 = vsel %vm336, %v307, 0
        %v347 = vsel %vm336, %v308, 0
        %v350 = vsel %vm336, %v309, 0
        %v353 = vsel %vm336, %v310, 0
        %v356 = vsel %vm336, %v311, 0
        %v359 = vsel %vm336, %v312, 0
        %v362 = vsel %vm336, %v313, 0
        %v365 = vsel %vm336, %v314, 0
        %v368 = vsel %vm336, %v315, 0
        %v371 = vsel %vm336, %v316, 0
        %v374 = vsel %vm336, %v317, 0
        %v377 = vsel %vm336, %v318, 0
        %v380 = vsel %vm336, %v319, 0
        %v383 = vsel %vm336, %v320, 0
        %vm385 = vcmask 1041408
        %v387 = vsel %vm385, %v333, 0
        %389 = vmatpush.bf16.msra.mxu0 0
        %390 = vmatpush.bf16.msra.mxu0 0
        %391 = vmatpush.bf16.msra.mxu0 0
        %392 = vmatpush.bf16.msra.mxu0 0
        %393 = vmatpush.bf16.msra.mxu0 0
        %394 = vmatpush.bf16.msra.mxu0 %v387
        %395 = vmatpush.bf16.msra.mxu0 %v332
        %396 = vmatpush.bf16.msra.mxu0 %v331
        %397 = vmatmul.bf16.gmra.mxu0 %v338
        %v398 = vpop.f32.mrf.mxu0
        %v399 = vadd.f32 %v239, %v398
        %v400 = vpop.f32.mrf.mxu0
        %v401 = vadd.f32 %v239, %v400
        %402 = vmatmul.bf16.gmra.mxu0 %v341
        %v403 = vpop.f32.mrf.mxu0
        %v404 = vadd.f32 %v239, %v403
        %v405 = vpop.f32.mrf.mxu0
        %v406 = vadd.f32 %v239, %v405
        %407 = vmatmul.bf16.gmra.mxu0 %v344
        %v408 = vpop.f32.mrf.mxu0
        %v409 = vadd.f32 %v239, %v408
        %v410 = vpop.f32.mrf.mxu0
        %v411 = vadd.f32 %v239, %v410
        %412 = vmatmul.bf16.gmra.mxu0 %v347
        %v413 = vpop.f32.mrf.mxu0
        %v414 = vadd.f32 %v239, %v413
        %v415 = vpop.f32.mrf.mxu0
        %v416 = vadd.f32 %v239, %v415
        %417 = vmatmul.bf16.gmra.mxu0 %v350
        %v418 = vpop.f32.mrf.mxu0
        %v419 = vadd.f32 %v239, %v418
        %v420 = vpop.f32.mrf.mxu0
        %v421 = vadd.f32 %v239, %v420
        %422 = vmatmul.bf16.gmra.mxu0 %v353
        %v423 = vpop.f32.mrf.mxu0
        %v424 = vadd.f32 %v239, %v423
        %v425 = vpop.f32.mrf.mxu0
        %v426 = vadd.f32 %v239, %v425
        %427 = vmatmul.bf16.gmra.mxu0 %v356
        %v428 = vpop.f32.mrf.mxu0
        %v429 = vadd.f32 %v239, %v428
        %v430 = vpop.f32.mrf.mxu0
        %v431 = vadd.f32 %v239, %v430
        %432 = vmatmul.bf16.gmra.mxu0 %v359
        %v433 = vpop.f32.mrf.mxu0
        %v434 = vadd.f32 %v239, %v433
        %v435 = vpop.f32.mrf.mxu0
        %v436 = vadd.f32 %v239, %v435
        %437 = vmatmul.bf16.gmra.mxu0 %v362
        %v438 = vpop.f32.mrf.mxu0
        %v439 = vadd.f32 %v239, %v438
        %v440 = vpop.f32.mrf.mxu0
        %v441 = vadd.f32 %v239, %v440
        %442 = vmatmul.bf16.gmra.mxu0 %v365
        %v443 = vpop.f32.mrf.mxu0
        %v444 = vadd.f32 %v239, %v443
        %v445 = vpop.f32.mrf.mxu0
        %v446 = vadd.f32 %v239, %v445
        %447 = vmatmul.bf16.gmra.mxu0 %v368
        %v448 = vpop.f32.mrf.mxu0
        %v449 = vadd.f32 %v239, %v448
        %v450 = vpop.f32.mrf.mxu0
        %v451 = vadd.f32 %v239, %v450
        %452 = vmatmul.bf16.gmra.mxu0 %v371
        %v453 = vpop.f32.mrf.mxu0
        %v454 = vadd.f32 %v239, %v453
        %v455 = vpop.f32.mrf.mxu0
        %v456 = vadd.f32 %v239, %v455
        %457 = vmatmul.bf16.gmra.mxu0 %v374
        %v458 = vpop.f32.mrf.mxu0
        %v459 = vadd.f32 %v239, %v458
        %v460 = vpop.f32.mrf.mxu0
        %v461 = vadd.f32 %v239, %v460
        %462 = vmatmul.bf16.gmra.mxu0 %v377
        %v463 = vpop.f32.mrf.mxu0
        %v464 = vadd.f32 %v239, %v463
        %v465 = vpop.f32.mrf.mxu0
        %v466 = vadd.f32 %v239, %v465
        %467 = vmatmul.bf16.gmra.mxu0 %v380
        %v468 = vpop.f32.mrf.mxu0
        %v469 = vadd.f32 %v239, %v468
        %v470 = vpop.f32.mrf.mxu0
        %v471 = vadd.f32 %v239, %v470
        %472 = vmatmul.bf16.gmra.mxu0 %v383
        %v473 = vpop.f32.mrf.mxu0
        %v474 = vadd.f32 %v239, %v473
        %v475 = vpop.f32.mrf.mxu0
        %v476 = vadd.f32 %v239, %v475
        %477 = vdwg.mxu0
        %v478 = vmul.f32 %v399, %v399
        %v479 = vmul.f32 %v401, %v401
        %v480 = vmul.f32 %v404, %v404
        %v481 = vmul.f32 %v406, %v406
        %v482 = vmul.f32 %v409, %v409
        %v483 = vmul.f32 %v411, %v411
        %v484 = vmul.f32 %v414, %v414
        %v485 = vmul.f32 %v416, %v416
        %v486 = vmul.f32 %v419, %v419
        %v487 = vmul.f32 %v421, %v421
        %v488 = vmul.f32 %v424, %v424
        %v489 = vmul.f32 %v426, %v426
        %v490 = vmul.f32 %v429, %v429
        %v491 = vmul.f32 %v431, %v431
        %v492 = vmul.f32 %v434, %v434
        %v493 = vmul.f32 %v436, %v436
        %v494 = vmul.f32 %v439, %v439
        %v495 = vmul.f32 %v441, %v441
        %v496 = vmul.f32 %v444, %v444
        %v497 = vmul.f32 %v446, %v446
        %v498 = vmul.f32 %v449, %v449
        %v499 = vmul.f32 %v451, %v451
        %v500 = vmul.f32 %v454, %v454
        %v501 = vmul.f32 %v456, %v456
        %v502 = vmul.f32 %v459, %v459
        %v503 = vmul.f32 %v461, %v461
        %v504 = vmul.f32 %v464, %v464
        %v505 = vmul.f32 %v466, %v466
        %v506 = vmul.f32 %v469, %v469
        %v507 = vmul.f32 %v471, %v471
        %v508 = vmul.f32 %v474, %v474
        %v509 = vmul.f32 %v476, %v476
        %510 = vadd.xlane.f32.xlu0 %v478
        %v511 = vpop.xlane.xlu0 %510
        %512 = vadd.xlane.f32.xlu0 %v479
        %v513 = vpop.xlane.xlu0 %512
        %514 = vadd.xlane.f32.xlu0 %v480
        %v515 = vpop.xlane.xlu0 %514
        %516 = vadd.xlane.f32.xlu0 %v481
        %v517 = vpop.xlane.xlu0 %516
        %518 = vadd.xlane.f32.xlu0 %v482
        %v519 = vpop.xlane.xlu0 %518
        %520 = vadd.xlane.f32.xlu0 %v483
        %v521 = vpop.xlane.xlu0 %520
        %522 = vadd.xlane.f32.xlu0 %v484
        %v523 = vpop.xlane.xlu0 %522
        %524 = vadd.xlane.f32.xlu0 %v485
        %v525 = vpop.xlane.xlu0 %524
        %526 = vadd.xlane.f32.xlu0 %v486
        %v527 = vpop.xlane.xlu0 %526
        %528 = vadd.xlane.f32.xlu0 %v487
        %v529 = vpop.xlane.xlu0 %528
        %530 = vadd.xlane.f32.xlu0 %v488
        %v531 = vpop.xlane.xlu0 %530
        %532 = vadd.xlane.f32.xlu0 %v489
        %v533 = vpop.xlane.xlu0 %532
        %534 = vadd.xlane.f32.xlu0 %v490
        %v535 = vpop.xlane.xlu0 %534
        %536 = vadd.xlane.f32.xlu0 %v491
        %v537 = vpop.xlane.xlu0 %536
        %538 = vadd.xlane.f32.xlu0 %v492
        %v539 = vpop.xlane.xlu0 %538
        %540 = vadd.xlane.f32.xlu0 %v493
        %v541 = vpop.xlane.xlu0 %540
        %542 = vadd.xlane.f32.xlu0 %v494
        %v543 = vpop.xlane.xlu0 %542
        %544 = vadd.xlane.f32.xlu0 %v495
        %v545 = vpop.xlane.xlu0 %544
        %546 = vadd.xlane.f32.xlu0 %v496
        %v547 = vpop.xlane.xlu0 %546
        %548 = vadd.xlane.f32.xlu0 %v497
        %v549 = vpop.xlane.xlu0 %548
        %550 = vadd.xlane.f32.xlu0 %v498
        %v551 = vpop.xlane.xlu0 %550
        %552 = vadd.xlane.f32.xlu0 %v499
        %v553 = vpop.xlane.xlu0 %552
        %554 = vadd.xlane.f32.xlu0 %v500
        %v555 = vpop.xlane.xlu0 %554
        %556 = vadd.xlane.f32.xlu0 %v501
        %v557 = vpop.xlane.xlu0 %556
        %558 = vadd.xlane.f32.xlu0 %v502
        %v559 = vpop.xlane.xlu0 %558
        %560 = vadd.xlane.f32.xlu0 %v503
        %v561 = vpop.xlane.xlu0 %560
        %562 = vadd.xlane.f32.xlu0 %v504
        %v563 = vpop.xlane.xlu0 %562
        %564 = vadd.xlane.f32.xlu0 %v505
        %v565 = vpop.xlane.xlu0 %564
        %566 = vadd.xlane.f32.xlu0 %v506
        %v567 = vpop.xlane.xlu0 %566
        %568 = vadd.xlane.f32.xlu0 %v507
        %v569 = vpop.xlane.xlu0 %568
        %570 = vadd.xlane.f32.xlu0 %v508
        %v571 = vpop.xlane.xlu0 %570
        %572 = vadd.xlane.f32.xlu0 %v509
        %v573 = vpop.xlane.xlu0 %572
        %v574 = vmax.f32 %v511, 1e-24
        %v575 = vmax.f32 %v513, 1e-24
        %v576 = vmax.f32 %v515, 1e-24
        %v577 = vmax.f32 %v517, 1e-24
        %v578 = vmax.f32 %v519, 1e-24
        %v579 = vmax.f32 %v521, 1e-24
        %v580 = vmax.f32 %v523, 1e-24
        %v581 = vmax.f32 %v525, 1e-24
        %v582 = vmax.f32 %v527, 1e-24
        %v583 = vmax.f32 %v529, 1e-24
        %v584 = vmax.f32 %v531, 1e-24
        %v585 = vmax.f32 %v533, 1e-24
        %v586 = vmax.f32 %v535, 1e-24
        %v587 = vmax.f32 %v537, 1e-24
        %v588 = vmax.f32 %v539, 1e-24
        %v589 = vmax.f32 %v541, 1e-24
        %v590 = vmax.f32 %v543, 1e-24
        %v591 = vmax.f32 %v545, 1e-24
        %v592 = vmax.f32 %v547, 1e-24
        %v593 = vmax.f32 %v549, 1e-24
        %v594 = vmax.f32 %v551, 1e-24
        %v595 = vmax.f32 %v553, 1e-24
        %v596 = vmax.f32 %v555, 1e-24
        %v597 = vmax.f32 %v557, 1e-24
        %v598 = vmax.f32 %v559, 1e-24
        %v599 = vmax.f32 %v561, 1e-24
        %v600 = vmax.f32 %v563, 1e-24
        %v601 = vmax.f32 %v565, 1e-24
        %v602 = vmax.f32 %v567, 1e-24
        %v603 = vmax.f32 %v569, 1e-24
        %v604 = vmax.f32 %v571, 1e-24
        %v605 = vmax.f32 %v573, 1e-24
        %v606 = vrsqrt.pop %v574
        %v607 = vmul.f32 %v606, %v574
        %v608 = vmul.f32 %v607, %v606
        %v609 = vmul.f32 0.5, %v608
        %v610 = vsub.f32 1.5, %v609
        %v611 = vmul.f32 %v606, %v610
        %vm612 = vweird.f32 %v574
        %vm613 = vweird.f32 %v606
        %vm614 = vmor %vm612, %vm613
        %v615 = vsel %vm614, %v606, %v611
        %v616 = vrsqrt.pop %v575
        %v617 = vmul.f32 %v616, %v575
        %v618 = vmul.f32 %v617, %v616
        %v619 = vmul.f32 0.5, %v618
        %v620 = vsub.f32 1.5, %v619
        %v621 = vmul.f32 %v616, %v620
        %vm622 = vweird.f32 %v575
        %vm623 = vweird.f32 %v616
        %vm624 = vmor %vm622, %vm623
        %v625 = vsel %vm624, %v616, %v621
        %v626 = vrsqrt.pop %v576
        %v627 = vmul.f32 %v626, %v576
        %v628 = vmul.f32 %v627, %v626
        %v629 = vmul.f32 0.5, %v628
        %v630 = vsub.f32 1.5, %v629
        %v631 = vmul.f32 %v626, %v630
        %vm632 = vweird.f32 %v576
        %vm633 = vweird.f32 %v626
        %vm634 = vmor %vm632, %vm633
        %v635 = vsel %vm634, %v626, %v631
        %v636 = vrsqrt.pop %v577
        %v637 = vmul.f32 %v636, %v577
        %v638 = vmul.f32 %v637, %v636
        %v639 = vmul.f32 0.5, %v638
        %v640 = vsub.f32 1.5, %v639
        %v641 = vmul.f32 %v636, %v640
        %vm642 = vweird.f32 %v577
        %vm643 = vweird.f32 %v636
        %vm644 = vmor %vm642, %vm643
        %v645 = vsel %vm644, %v636, %v641
        %v646 = vrsqrt.pop %v578
        %v647 = vmul.f32 %v646, %v578
        %v648 = vmul.f32 %v647, %v646
        %v649 = vmul.f32 0.5, %v648
        %v650 = vsub.f32 1.5, %v649
        %v651 = vmul.f32 %v646, %v650
        %vm652 = vweird.f32 %v578
        %vm653 = vweird.f32 %v646
        %vm654 = vmor %vm652, %vm653
        %v655 = vsel %vm654, %v646, %v651
        %v656 = vrsqrt.pop %v579
        %v657 = vmul.f32 %v656, %v579
        %v658 = vmul.f32 %v657, %v656
        %v659 = vmul.f32 0.5, %v658
        %v660 = vsub.f32 1.5, %v659
        %v661 = vmul.f32 %v656, %v660
        %vm662 = vweird.f32 %v579
        %vm663 = vweird.f32 %v656
        %vm664 = vmor %vm662, %vm663
        %v665 = vsel %vm664, %v656, %v661
        %v666 = vrsqrt.pop %v580
        %v667 = vmul.f32 %v666, %v580
        %v668 = vmul.f32 %v667, %v666
        %v669 = vmul.f32 0.5, %v668
        %v670 = vsub.f32 1.5, %v669
        %v671 = vmul.f32 %v666, %v670
        %vm672 = vweird.f32 %v580
        %vm673 = vweird.f32 %v666
        %vm674 = vmor %vm672, %vm673
        %v675 = vsel %vm674, %v666, %v671
        %v676 = vrsqrt.pop %v581
        %v677 = vmul.f32 %v676, %v581
        %v678 = vmul.f32 %v677, %v676
        %v679 = vmul.f32 0.5, %v678
        %v680 = vsub.f32 1.5, %v679
        %v681 = vmul.f32 %v676, %v680
        %vm682 = vweird.f32 %v581
        %vm683 = vweird.f32 %v676
        %vm684 = vmor %vm682, %vm683
        %v685 = vsel %vm684, %v676, %v681
        %v686 = vrsqrt.pop %v582
        %v687 = vmul.f32 %v686, %v582
        %v688 = vmul.f32 %v687, %v686
        %v689 = vmul.f32 0.5, %v688
        %v690 = vsub.f32 1.5, %v689
        %v691 = vmul.f32 %v686, %v690
        %vm692 = vweird.f32 %v582
        %vm693 = vweird.f32 %v686
        %vm694 = vmor %vm692, %vm693
        %v695 = vsel %vm694, %v686, %v691
        %v696 = vrsqrt.pop %v583
        %v697 = vmul.f32 %v696, %v583
        %v698 = vmul.f32 %v697, %v696
        %v699 = vmul.f32 0.5, %v698
        %v700 = vsub.f32 1.5, %v699
        %v701 = vmul.f32 %v696, %v700
        %vm702 = vweird.f32 %v583
        %vm703 = vweird.f32 %v696
        %vm704 = vmor %vm702, %vm703
        %v705 = vsel %vm704, %v696, %v701
        %v706 = vrsqrt.pop %v584
        %v707 = vmul.f32 %v706, %v584
        %v708 = vmul.f32 %v707, %v706
        %v709 = vmul.f32 0.5, %v708
        %v710 = vsub.f32 1.5, %v709
        %v711 = vmul.f32 %v706, %v710
        %vm712 = vweird.f32 %v584
        %vm713 = vweird.f32 %v706
        %vm714 = vmor %vm712, %vm713
        %v715 = vsel %vm714, %v706, %v711
        %v716 = vrsqrt.pop %v585
        %v717 = vmul.f32 %v716, %v585
        %v718 = vmul.f32 %v717, %v716
        %v719 = vmul.f32 0.5, %v718
        %v720 = vsub.f32 1.5, %v719
        %v721 = vmul.f32 %v716, %v720
        %vm722 = vweird.f32 %v585
        %vm723 = vweird.f32 %v716
        %vm724 = vmor %vm722, %vm723
        %v725 = vsel %vm724, %v716, %v721
        %v726 = vrsqrt.pop %v586
        %v727 = vmul.f32 %v726, %v586
        %v728 = vmul.f32 %v727, %v726
        %v729 = vmul.f32 0.5, %v728
        %v730 = vsub.f32 1.5, %v729
        %v731 = vmul.f32 %v726, %v730
        %vm732 = vweird.f32 %v586
        %vm733 = vweird.f32 %v726
        %vm734 = vmor %vm732, %vm733
        %v735 = vsel %vm734, %v726, %v731
        %v736 = vrsqrt.pop %v587
        %v737 = vmul.f32 %v736, %v587
        %v738 = vmul.f32 %v737, %v736
        %v739 = vmul.f32 0.5, %v738
        %v740 = vsub.f32 1.5, %v739
        %v741 = vmul.f32 %v736, %v740
        %vm742 = vweird.f32 %v587
        %vm743 = vweird.f32 %v736
        %vm744 = vmor %vm742, %vm743
        %v745 = vsel %vm744, %v736, %v741
        %v746 = vrsqrt.pop %v588
        %v747 = vmul.f32 %v746, %v588
        %v748 = vmul.f32 %v747, %v746
        %v749 = vmul.f32 0.5, %v748
        %v750 = vsub.f32 1.5, %v749
        %v751 = vmul.f32 %v746, %v750
        %vm752 = vweird.f32 %v588
        %vm753 = vweird.f32 %v746
        %vm754 = vmor %vm752, %vm753
        %v755 = vsel %vm754, %v746, %v751
        %v756 = vrsqrt.pop %v589
        %v757 = vmul.f32 %v756, %v589
        %v758 = vmul.f32 %v757, %v756
        %v759 = vmul.f32 0.5, %v758
        %v760 = vsub.f32 1.5, %v759
        %v761 = vmul.f32 %v756, %v760
        %vm762 = vweird.f32 %v589
        %vm763 = vweird.f32 %v756
        %vm764 = vmor %vm762, %vm763
        %v765 = vsel %vm764, %v756, %v761
        %v766 = vrsqrt.pop %v590
        %v767 = vmul.f32 %v766, %v590
        %v768 = vmul.f32 %v767, %v766
        %v769 = vmul.f32 0.5, %v768
        %v770 = vsub.f32 1.5, %v769
        %v771 = vmul.f32 %v766, %v770
        %vm772 = vweird.f32 %v590
        %vm773 = vweird.f32 %v766
        %vm774 = vmor %vm772, %vm773
        %v775 = vsel %vm774, %v766, %v771
        %v776 = vrsqrt.pop %v591
        %v777 = vmul.f32 %v776, %v591
        %v778 = vmul.f32 %v777, %v776
        %v779 = vmul.f32 0.5, %v778
        %v780 = vsub.f32 1.5, %v779
        %v781 = vmul.f32 %v776, %v780
        %vm782 = vweird.f32 %v591
        %vm783 = vweird.f32 %v776
        %vm784 = vmor %vm782, %vm783
        %v785 = vsel %vm784, %v776, %v781
        %v786 = vrsqrt.pop %v592
        %v787 = vmul.f32 %v786, %v592
        %v788 = vmul.f32 %v787, %v786
        %v789 = vmul.f32 0.5, %v788
        %v790 = vsub.f32 1.5, %v789
        %v791 = vmul.f32 %v786, %v790
        %vm792 = vweird.f32 %v592
        %vm793 = vweird.f32 %v786
        %vm794 = vmor %vm792, %vm793
        %v795 = vsel %vm794, %v786, %v791
        %v796 = vrsqrt.pop %v593
        %v797 = vmul.f32 %v796, %v593
        %v798 = vmul.f32 %v797, %v796
        %v799 = vmul.f32 0.5, %v798
        %v800 = vsub.f32 1.5, %v799
        %v801 = vmul.f32 %v796, %v800
        %vm802 = vweird.f32 %v593
        %vm803 = vweird.f32 %v796
        %vm804 = vmor %vm802, %vm803
        %v805 = vsel %vm804, %v796, %v801
        %v806 = vrsqrt.pop %v594
        %v807 = vmul.f32 %v806, %v594
        %v808 = vmul.f32 %v807, %v806
        %v809 = vmul.f32 0.5, %v808
        %v810 = vsub.f32 1.5, %v809
        %v811 = vmul.f32 %v806, %v810
        %vm812 = vweird.f32 %v594
        %vm813 = vweird.f32 %v806
        %vm814 = vmor %vm812, %vm813
        %v815 = vsel %vm814, %v806, %v811
        %v816 = vrsqrt.pop %v595
        %v817 = vmul.f32 %v816, %v595
        %v818 = vmul.f32 %v817, %v816
        %v819 = vmul.f32 0.5, %v818
        %v820 = vsub.f32 1.5, %v819
        %v821 = vmul.f32 %v816, %v820
        %vm822 = vweird.f32 %v595
        %vm823 = vweird.f32 %v816
        %vm824 = vmor %vm822, %vm823
        %v825 = vsel %vm824, %v816, %v821
        %v826 = vrsqrt.pop %v596
        %v827 = vmul.f32 %v826, %v596
        %v828 = vmul.f32 %v827, %v826
        %v829 = vmul.f32 0.5, %v828
        %v830 = vsub.f32 1.5, %v829
        %v831 = vmul.f32 %v826, %v830
        %vm832 = vweird.f32 %v596
        %vm833 = vweird.f32 %v826
        %vm834 = vmor %vm832, %vm833
        %v835 = vsel %vm834, %v826, %v831
        %v836 = vrsqrt.pop %v597
        %v837 = vmul.f32 %v836, %v597
        %v838 = vmul.f32 %v837, %v836
        %v839 = vmul.f32 0.5, %v838
        %v840 = vsub.f32 1.5, %v839
        %v841 = vmul.f32 %v836, %v840
        %vm842 = vweird.f32 %v597
        %vm843 = vweird.f32 %v836
        %vm844 = vmor %vm842, %vm843
        %v845 = vsel %vm844, %v836, %v841
        %v846 = vrsqrt.pop %v598
        %v847 = vmul.f32 %v846, %v598
        %v848 = vmul.f32 %v847, %v846
        %v849 = vmul.f32 0.5, %v848
        %v850 = vsub.f32 1.5, %v849
        %v851 = vmul.f32 %v846, %v850
        %vm852 = vweird.f32 %v598
        %vm853 = vweird.f32 %v846
        %vm854 = vmor %vm852, %vm853
        %v855 = vsel %vm854, %v846, %v851
        %v856 = vrsqrt.pop %v599
        %v857 = vmul.f32 %v856, %v599
        %v858 = vmul.f32 %v857, %v856
        %v859 = vmul.f32 0.5, %v858
        %v860 = vsub.f32 1.5, %v859
        %v861 = vmul.f32 %v856, %v860
        %vm862 = vweird.f32 %v599
        %vm863 = vweird.f32 %v856
        %vm864 = vmor %vm862, %vm863
        %v865 = vsel %vm864, %v856, %v861
        %v866 = vrsqrt.pop %v600
        %v867 = vmul.f32 %v866, %v600
        %v868 = vmul.f32 %v867, %v866
        %v869 = vmul.f32 0.5, %v868
        %v870 = vsub.f32 1.5, %v869
        %v871 = vmul.f32 %v866, %v870
        %vm872 = vweird.f32 %v600
        %vm873 = vweird.f32 %v866
        %vm874 = vmor %vm872, %vm873
        %v875 = vsel %vm874, %v866, %v871
        %v876 = vrsqrt.pop %v601
        %v877 = vmul.f32 %v876, %v601
        %v878 = vmul.f32 %v877, %v876
        %v879 = vmul.f32 0.5, %v878
        %v880 = vsub.f32 1.5, %v879
        %v881 = vmul.f32 %v876, %v880
        %vm882 = vweird.f32 %v601
        %vm883 = vweird.f32 %v876
        %vm884 = vmor %vm882, %vm883
        %v885 = vsel %vm884, %v876, %v881
        %v886 = vrsqrt.pop %v602
        %v887 = vmul.f32 %v886, %v602
        %v888 = vmul.f32 %v887, %v886
        %v889 = vmul.f32 0.5, %v888
        %v890 = vsub.f32 1.5, %v889
        %v891 = vmul.f32 %v886, %v890
        %vm892 = vweird.f32 %v602
        %vm893 = vweird.f32 %v886
        %vm894 = vmor %vm892, %vm893
        %v895 = vsel %vm894, %v886, %v891
        %v896 = vrsqrt.pop %v603
        %v897 = vmul.f32 %v896, %v603
        %v898 = vmul.f32 %v897, %v896
        %v899 = vmul.f32 0.5, %v898
        %v900 = vsub.f32 1.5, %v899
        %v901 = vmul.f32 %v896, %v900
        %vm902 = vweird.f32 %v603
        %vm903 = vweird.f32 %v896
        %vm904 = vmor %vm902, %vm903
        %v905 = vsel %vm904, %v896, %v901
        %v906 = vrsqrt.pop %v604
        %v907 = vmul.f32 %v906, %v604
        %v908 = vmul.f32 %v907, %v906
        %v909 = vmul.f32 0.5, %v908
        %v910 = vsub.f32 1.5, %v909
        %v911 = vmul.f32 %v906, %v910
        %vm912 = vweird.f32 %v604
        %vm913 = vweird.f32 %v906
        %vm914 = vmor %vm912, %vm913
        %v915 = vsel %vm914, %v906, %v911
        %v916 = vrsqrt.pop %v605
        %v917 = vmul.f32 %v916, %v605
        %v918 = vmul.f32 %v917, %v916
        %v919 = vmul.f32 0.5, %v918
        %v920 = vsub.f32 1.5, %v919
        %v921 = vmul.f32 %v916, %v920
        %vm922 = vweird.f32 %v605
        %vm923 = vweird.f32 %v916
        %vm924 = vmor %vm922, %vm923
        %v925 = vsel %vm924, %v916, %v921
        %v926 = vmul.f32 %v399, %v615
        %v927 = vmul.f32 %v401, %v625
        %v928 = vmul.f32 %v404, %v635
        %v929 = vmul.f32 %v406, %v645
        %v930 = vmul.f32 %v409, %v655
        %v931 = vmul.f32 %v411, %v665
        %v932 = vmul.f32 %v414, %v675
        %v933 = vmul.f32 %v416, %v685
        %v934 = vmul.f32 %v419, %v695
        %v935 = vmul.f32 %v421, %v705
        %v936 = vmul.f32 %v424, %v715
        %v937 = vmul.f32 %v426, %v725
        %v938 = vmul.f32 %v429, %v735
        %v939 = vmul.f32 %v431, %v745
        %v940 = vmul.f32 %v434, %v755
        %v941 = vmul.f32 %v436, %v765
        %v942 = vmul.f32 %v439, %v775
        %v943 = vmul.f32 %v441, %v785
        %v944 = vmul.f32 %v444, %v795
        %v945 = vmul.f32 %v446, %v805
        %v946 = vmul.f32 %v449, %v815
        %v947 = vmul.f32 %v451, %v825
        %v948 = vmul.f32 %v454, %v835
        %v949 = vmul.f32 %v456, %v845
        %v950 = vmul.f32 %v459, %v855
        %v951 = vmul.f32 %v461, %v865
        %v952 = vmul.f32 %v464, %v875
        %v953 = vmul.f32 %v466, %v885
        %v954 = vmul.f32 %v469, %v895
        %v955 = vmul.f32 %v471, %v905
        %v956 = vmul.f32 %v474, %v915
        %v957 = vmul.f32 %v476, %v925
        %v958 = vld [vmem:[%s3] sm:$0x1]
        %v960 = vperm.slane %v958, 0
        %v962 = vmul.f32 %v926, %v960
        %v963 = vmul.f32 %v927, %v960
        %v964 = vmul.f32 %v928, %v960
        %v965 = vmul.f32 %v929, %v960
        %v966 = vmul.f32 %v930, %v960
        %v967 = vmul.f32 %v931, %v960
        %v968 = vmul.f32 %v932, %v960
        %v969 = vmul.f32 %v933, %v960
        %v970 = vmul.f32 %v934, %v960
        %v971 = vmul.f32 %v935, %v960
        %v972 = vmul.f32 %v936, %v960
        %v973 = vmul.f32 %v937, %v960
        %v974 = vmul.f32 %v938, %v960
        %v975 = vmul.f32 %v939, %v960
        %v976 = vmul.f32 %v940, %v960
        %v977 = vmul.f32 %v941, %v960
        %v978 = vmul.f32 %v942, %v960
        %v979 = vmul.f32 %v943, %v960
        %v980 = vmul.f32 %v944, %v960
        %v981 = vmul.f32 %v945, %v960
        %v982 = vmul.f32 %v946, %v960
        %v983 = vmul.f32 %v947, %v960
        %v984 = vmul.f32 %v948, %v960
        %v985 = vmul.f32 %v949, %v960
        %v986 = vmul.f32 %v950, %v960
        %v987 = vmul.f32 %v951, %v960
        %v988 = vmul.f32 %v952, %v960
        %v989 = vmul.f32 %v953, %v960
        %v990 = vmul.f32 %v954, %v960
        %v991 = vmul.f32 %v955, %v960
        %v992 = vmul.f32 %v956, %v960
        %v993 = vmul.f32 %v957, %v960
        %v994 = vsub.f32 0.0, %v962
        %v995 = vsub.f32 0.0, %v963
        %v996 = vsub.f32 0.0, %v964
        %v997 = vsub.f32 0.0, %v965
        %v998 = vsub.f32 0.0, %v966
        %v999 = vsub.f32 0.0, %v967
        %v1000 = vsub.f32 0.0, %v968
        %v1001 = vsub.f32 0.0, %v969
        %v1002 = vsub.f32 0.0, %v970
        %v1003 = vsub.f32 0.0, %v971
        %v1004 = vsub.f32 0.0, %v972
        %v1005 = vsub.f32 0.0, %v973
        %v1006 = vsub.f32 0.0, %v974
        %v1007 = vsub.f32 0.0, %v975
        %v1008 = vsub.f32 0.0, %v976
        %v1009 = vsub.f32 0.0, %v977
        %v1010 = vsub.f32 0.0, %v978
        %v1011 = vsub.f32 0.0, %v979
        %v1012 = vsub.f32 0.0, %v980
        %v1013 = vsub.f32 0.0, %v981
        %v1014 = vsub.f32 0.0, %v982
        %v1015 = vsub.f32 0.0, %v983
        %v1016 = vsub.f32 0.0, %v984
        %v1017 = vsub.f32 0.0, %v985
        %v1018 = vsub.f32 0.0, %v986
        %v1019 = vsub.f32 0.0, %v987
        %v1020 = vsub.f32 0.0, %v988
        %v1021 = vsub.f32 0.0, %v989
        %v1022 = vsub.f32 0.0, %v990
        %v1023 = vsub.f32 0.0, %v991
        %v1024 = vsub.f32 0.0, %v992
        %v1025 = vsub.f32 0.0, %v993
        %v1026 = vmul.f32 %v994, 1.442695
        %v1027 = vpow.pop %v1026
        %v1028 = vmul.f32 %v995, 1.442695
        %v1029 = vpow.pop %v1028
        %v1030 = vmul.f32 %v996, 1.442695
        %v1031 = vpow.pop %v1030
        %v1032 = vmul.f32 %v997, 1.442695
        %v1033 = vpow.pop %v1032
        %v1034 = vmul.f32 %v998, 1.442695
        %v1035 = vpow.pop %v1034
        %v1036 = vmul.f32 %v999, 1.442695
        %v1037 = vpow.pop %v1036
        %v1038 = vmul.f32 %v1000, 1.442695
        %v1039 = vpow.pop %v1038
        %v1040 = vmul.f32 %v1001, 1.442695
        %v1041 = vpow.pop %v1040
        %v1042 = vmul.f32 %v1002, 1.442695
        %v1043 = vpow.pop %v1042
        %v1044 = vmul.f32 %v1003, 1.442695
        %v1045 = vpow.pop %v1044
        %v1046 = vmul.f32 %v1004, 1.442695
        %v1047 = vpow.pop %v1046
        %v1048 = vmul.f32 %v1005, 1.442695
        %v1049 = vpow.pop %v1048
        %v1050 = vmul.f32 %v1006, 1.442695
        %v1051 = vpow.pop %v1050
        %v1052 = vmul.f32 %v1007, 1.442695
        %v1053 = vpow.pop %v1052
        %v1054 = vmul.f32 %v1008, 1.442695
        %v1055 = vpow.pop %v1054
        %v1056 = vmul.f32 %v1009, 1.442695
        %v1057 = vpow.pop %v1056
        %v1058 = vmul.f32 %v1010, 1.442695
        %v1059 = vpow.pop %v1058
        %v1060 = vmul.f32 %v1011, 1.442695
        %v1061 = vpow.pop %v1060
        %v1062 = vmul.f32 %v1012, 1.442695
        %v1063 = vpow.pop %v1062
        %v1064 = vmul.f32 %v1013, 1.442695
        %v1065 = vpow.pop %v1064
        %v1066 = vmul.f32 %v1014, 1.442695
        %v1067 = vpow.pop %v1066
        %v1068 = vmul.f32 %v1015, 1.442695
        %v1069 = vpow.pop %v1068
        %v1070 = vmul.f32 %v1016, 1.442695
        %v1071 = vpow.pop %v1070
        %v1072 = vmul.f32 %v1017, 1.442695
        %v1073 = vpow.pop %v1072
        %v1074 = vmul.f32 %v1018, 1.442695
        %v1075 = vpow.pop %v1074
        %v1076 = vmul.f32 %v1019, 1.442695
        %v1077 = vpow.pop %v1076
        %v1078 = vmul.f32 %v1020, 1.442695
        %v1079 = vpow.pop %v1078
        %v1080 = vmul.f32 %v1021, 1.442695
        %v1081 = vpow.pop %v1080
        %v1082 = vmul.f32 %v1022, 1.442695
        %v1083 = vpow.pop %v1082
        %v1084 = vmul.f32 %v1023, 1.442695
        %v1085 = vpow.pop %v1084
        %v1086 = vmul.f32 %v1024, 1.442695
        %v1087 = vpow.pop %v1086
        %v1088 = vmul.f32 %v1025, 1.442695
        %v1089 = vpow.pop %v1088
        %v1090 = vadd.f32 %v1027, 1.0
        %v1091 = vadd.f32 %v1029, 1.0
        %v1092 = vadd.f32 %v1031, 1.0
        %v1093 = vadd.f32 %v1033, 1.0
        %v1094 = vadd.f32 %v1035, 1.0
        %v1095 = vadd.f32 %v1037, 1.0
        %v1096 = vadd.f32 %v1039, 1.0
        %v1097 = vadd.f32 %v1041, 1.0
        %v1098 = vadd.f32 %v1043, 1.0
        %v1099 = vadd.f32 %v1045, 1.0
        %v1100 = vadd.f32 %v1047, 1.0
        %v1101 = vadd.f32 %v1049, 1.0
        %v1102 = vadd.f32 %v1051, 1.0
        %v1103 = vadd.f32 %v1053, 1.0
        %v1104 = vadd.f32 %v1055, 1.0
        %v1105 = vadd.f32 %v1057, 1.0
        %v1106 = vadd.f32 %v1059, 1.0
        %v1107 = vadd.f32 %v1061, 1.0
        %v1108 = vadd.f32 %v1063, 1.0
        %v1109 = vadd.f32 %v1065, 1.0
        %v1110 = vadd.f32 %v1067, 1.0
        %v1111 = vadd.f32 %v1069, 1.0
        %v1112 = vadd.f32 %v1071, 1.0
        %v1113 = vadd.f32 %v1073, 1.0
        %v1114 = vadd.f32 %v1075, 1.0
        %v1115 = vadd.f32 %v1077, 1.0
        %v1116 = vadd.f32 %v1079, 1.0
        %v1117 = vadd.f32 %v1081, 1.0
        %v1118 = vadd.f32 %v1083, 1.0
        %v1119 = vadd.f32 %v1085, 1.0
        %v1120 = vadd.f32 %v1087, 1.0
        %v1121 = vadd.f32 %v1089, 1.0
        %v1122 = vrcp.pop %v1090
        %v1123 = vmul.f32 %v1090, %v1122
        %v1124 = vsub.f32 1.0, %v1123
        %v1125 = vmul.f32 %v1122, %v1124
        %v1126 = vadd.f32 %v1122, %v1125
        %vm1127 = vweird.f32 %v1090
        %vm1128 = vweird.f32 %v1122
        %vm1129 = vmor %vm1127, %vm1128
        %v1130 = vsel %vm1129, %v1122, %v1126
        %v1131 = vand.u32 2147483647, %v1090
        %vm1132 = vcmp.eq.f32.partialorder %v1131, 8.507059e+37
        %v1133 = vand.u32 %v1090, 2147483648
        %v1134 = vor.u32 1.1754944e-38, %v1133
        %v1135 = vsel %vm1132, %v1134, %v1130
        %v1136 = vmul.f32 1.0, %v1135
        %v1137 = vrcp.pop %v1091
        %v1138 = vmul.f32 %v1091, %v1137
        %v1139 = vsub.f32 1.0, %v1138
        %v1140 = vmul.f32 %v1137, %v1139
        %v1141 = vadd.f32 %v1137, %v1140
        %vm1142 = vweird.f32 %v1091
        %vm1143 = vweird.f32 %v1137
        %vm1144 = vmor %vm1142, %vm1143
        %v1145 = vsel %vm1144, %v1137, %v1141
        %v1146 = vand.u32 2147483647, %v1091
        %vm1147 = vcmp.eq.f32.partialorder %v1146, 8.507059e+37
        %v1148 = vand.u32 %v1091, 2147483648
        %v1149 = vor.u32 1.1754944e-38, %v1148
        %v1150 = vsel %vm1147, %v1149, %v1145
        %v1151 = vmul.f32 1.0, %v1150
        %v1152 = vrcp.pop %v1092
        %v1153 = vmul.f32 %v1092, %v1152
        %v1154 = vsub.f32 1.0, %v1153
        %v1155 = vmul.f32 %v1152, %v1154
        %v1156 = vadd.f32 %v1152, %v1155
        %vm1157 = vweird.f32 %v1092
        %vm1158 = vweird.f32 %v1152
        %vm1159 = vmor %vm1157, %vm1158
        %v1160 = vsel %vm1159, %v1152, %v1156
        %v1161 = vand.u32 2147483647, %v1092
        %vm1162 = vcmp.eq.f32.partialorder %v1161, 8.507059e+37
        %v1163 = vand.u32 %v1092, 2147483648
        %v1164 = vor.u32 1.1754944e-38, %v1163
        %v1165 = vsel %vm1162, %v1164, %v1160
        %v1166 = vmul.f32 1.0, %v1165
        %v1167 = vrcp.pop %v1093
        %v1168 = vmul.f32 %v1093, %v1167
        %v1169 = vsub.f32 1.0, %v1168
        %v1170 = vmul.f32 %v1167, %v1169
        %v1171 = vadd.f32 %v1167, %v1170
        %vm1172 = vweird.f32 %v1093
        %vm1173 = vweird.f32 %v1167
        %vm1174 = vmor %vm1172, %vm1173
        %v1175 = vsel %vm1174, %v1167, %v1171
        %v1176 = vand.u32 2147483647, %v1093
        %vm1177 = vcmp.eq.f32.partialorder %v1176, 8.507059e+37
        %v1178 = vand.u32 %v1093, 2147483648
        %v1179 = vor.u32 1.1754944e-38, %v1178
        %v1180 = vsel %vm1177, %v1179, %v1175
        %v1181 = vmul.f32 1.0, %v1180
        %v1182 = vrcp.pop %v1094
        %v1183 = vmul.f32 %v1094, %v1182
        %v1184 = vsub.f32 1.0, %v1183
        %v1185 = vmul.f32 %v1182, %v1184
        %v1186 = vadd.f32 %v1182, %v1185
        %vm1187 = vweird.f32 %v1094
        %vm1188 = vweird.f32 %v1182
        %vm1189 = vmor %vm1187, %vm1188
        %v1190 = vsel %vm1189, %v1182, %v1186
        %v1191 = vand.u32 2147483647, %v1094
        %vm1192 = vcmp.eq.f32.partialorder %v1191, 8.507059e+37
        %v1193 = vand.u32 %v1094, 2147483648
        %v1194 = vor.u32 1.1754944e-38, %v1193
        %v1195 = vsel %vm1192, %v1194, %v1190
        %v1196 = vmul.f32 1.0, %v1195
        %v1197 = vrcp.pop %v1095
        %v1198 = vmul.f32 %v1095, %v1197
        %v1199 = vsub.f32 1.0, %v1198
        %v1200 = vmul.f32 %v1197, %v1199
        %v1201 = vadd.f32 %v1197, %v1200
        %vm1202 = vweird.f32 %v1095
        %vm1203 = vweird.f32 %v1197
        %vm1204 = vmor %vm1202, %vm1203
        %v1205 = vsel %vm1204, %v1197, %v1201
        %v1206 = vand.u32 2147483647, %v1095
        %vm1207 = vcmp.eq.f32.partialorder %v1206, 8.507059e+37
        %v1208 = vand.u32 %v1095, 2147483648
        %v1209 = vor.u32 1.1754944e-38, %v1208
        %v1210 = vsel %vm1207, %v1209, %v1205
        %v1211 = vmul.f32 1.0, %v1210
        %v1212 = vrcp.pop %v1096
        %v1213 = vmul.f32 %v1096, %v1212
        %v1214 = vsub.f32 1.0, %v1213
        %v1215 = vmul.f32 %v1212, %v1214
        %v1216 = vadd.f32 %v1212, %v1215
        %vm1217 = vweird.f32 %v1096
        %vm1218 = vweird.f32 %v1212
        %vm1219 = vmor %vm1217, %vm1218
        %v1220 = vsel %vm1219, %v1212, %v1216
        %v1221 = vand.u32 2147483647, %v1096
        %vm1222 = vcmp.eq.f32.partialorder %v1221, 8.507059e+37
        %v1223 = vand.u32 %v1096, 2147483648
        %v1224 = vor.u32 1.1754944e-38, %v1223
        %v1225 = vsel %vm1222, %v1224, %v1220
        %v1226 = vmul.f32 1.0, %v1225
        %v1227 = vrcp.pop %v1097
        %v1228 = vmul.f32 %v1097, %v1227
        %v1229 = vsub.f32 1.0, %v1228
        %v1230 = vmul.f32 %v1227, %v1229
        %v1231 = vadd.f32 %v1227, %v1230
        %vm1232 = vweird.f32 %v1097
        %vm1233 = vweird.f32 %v1227
        %vm1234 = vmor %vm1232, %vm1233
        %v1235 = vsel %vm1234, %v1227, %v1231
        %v1236 = vand.u32 2147483647, %v1097
        %vm1237 = vcmp.eq.f32.partialorder %v1236, 8.507059e+37
        %v1238 = vand.u32 %v1097, 2147483648
        %v1239 = vor.u32 1.1754944e-38, %v1238
        %v1240 = vsel %vm1237, %v1239, %v1235
        %v1241 = vmul.f32 1.0, %v1240
        %v1242 = vrcp.pop %v1098
        %v1243 = vmul.f32 %v1098, %v1242
        %v1244 = vsub.f32 1.0, %v1243
        %v1245 = vmul.f32 %v1242, %v1244
        %v1246 = vadd.f32 %v1242, %v1245
        %vm1247 = vweird.f32 %v1098
        %vm1248 = vweird.f32 %v1242
        %vm1249 = vmor %vm1247, %vm1248
        %v1250 = vsel %vm1249, %v1242, %v1246
        %v1251 = vand.u32 2147483647, %v1098
        %vm1252 = vcmp.eq.f32.partialorder %v1251, 8.507059e+37
        %v1253 = vand.u32 %v1098, 2147483648
        %v1254 = vor.u32 1.1754944e-38, %v1253
        %v1255 = vsel %vm1252, %v1254, %v1250
        %v1256 = vmul.f32 1.0, %v1255
        %v1257 = vrcp.pop %v1099
        %v1258 = vmul.f32 %v1099, %v1257
        %v1259 = vsub.f32 1.0, %v1258
        %v1260 = vmul.f32 %v1257, %v1259
        %v1261 = vadd.f32 %v1257, %v1260
        %vm1262 = vweird.f32 %v1099
        %vm1263 = vweird.f32 %v1257
        %vm1264 = vmor %vm1262, %vm1263
        %v1265 = vsel %vm1264, %v1257, %v1261
        %v1266 = vand.u32 2147483647, %v1099
        %vm1267 = vcmp.eq.f32.partialorder %v1266, 8.507059e+37
        %v1268 = vand.u32 %v1099, 2147483648
        %v1269 = vor.u32 1.1754944e-38, %v1268
        %v1270 = vsel %vm1267, %v1269, %v1265
        %v1271 = vmul.f32 1.0, %v1270
        %v1272 = vrcp.pop %v1100
        %v1273 = vmul.f32 %v1100, %v1272
        %v1274 = vsub.f32 1.0, %v1273
        %v1275 = vmul.f32 %v1272, %v1274
        %v1276 = vadd.f32 %v1272, %v1275
        %vm1277 = vweird.f32 %v1100
        %vm1278 = vweird.f32 %v1272
        %vm1279 = vmor %vm1277, %vm1278
        %v1280 = vsel %vm1279, %v1272, %v1276
        %v1281 = vand.u32 2147483647, %v1100
        %vm1282 = vcmp.eq.f32.partialorder %v1281, 8.507059e+37
        %v1283 = vand.u32 %v1100, 2147483648
        %v1284 = vor.u32 1.1754944e-38, %v1283
        %v1285 = vsel %vm1282, %v1284, %v1280
        %v1286 = vmul.f32 1.0, %v1285
        %v1287 = vrcp.pop %v1101
        %v1288 = vmul.f32 %v1101, %v1287
        %v1289 = vsub.f32 1.0, %v1288
        %v1290 = vmul.f32 %v1287, %v1289
        %v1291 = vadd.f32 %v1287, %v1290
        %vm1292 = vweird.f32 %v1101
        %vm1293 = vweird.f32 %v1287
        %vm1294 = vmor %vm1292, %vm1293
        %v1295 = vsel %vm1294, %v1287, %v1291
        %v1296 = vand.u32 2147483647, %v1101
        %vm1297 = vcmp.eq.f32.partialorder %v1296, 8.507059e+37
        %v1298 = vand.u32 %v1101, 2147483648
        %v1299 = vor.u32 1.1754944e-38, %v1298
        %v1300 = vsel %vm1297, %v1299, %v1295
        %v1301 = vmul.f32 1.0, %v1300
        %v1302 = vrcp.pop %v1102
        %v1303 = vmul.f32 %v1102, %v1302
        %v1304 = vsub.f32 1.0, %v1303
        %v1305 = vmul.f32 %v1302, %v1304
        %v1306 = vadd.f32 %v1302, %v1305
        %vm1307 = vweird.f32 %v1102
        %vm1308 = vweird.f32 %v1302
        %vm1309 = vmor %vm1307, %vm1308
        %v1310 = vsel %vm1309, %v1302, %v1306
        %v1311 = vand.u32 2147483647, %v1102
        %vm1312 = vcmp.eq.f32.partialorder %v1311, 8.507059e+37
        %v1313 = vand.u32 %v1102, 2147483648
        %v1314 = vor.u32 1.1754944e-38, %v1313
        %v1315 = vsel %vm1312, %v1314, %v1310
        %v1316 = vmul.f32 1.0, %v1315
        %v1317 = vrcp.pop %v1103
        %v1318 = vmul.f32 %v1103, %v1317
        %v1319 = vsub.f32 1.0, %v1318
        %v1320 = vmul.f32 %v1317, %v1319
        %v1321 = vadd.f32 %v1317, %v1320
        %vm1322 = vweird.f32 %v1103
        %vm1323 = vweird.f32 %v1317
        %vm1324 = vmor %vm1322, %vm1323
        %v1325 = vsel %vm1324, %v1317, %v1321
        %v1326 = vand.u32 2147483647, %v1103
        %vm1327 = vcmp.eq.f32.partialorder %v1326, 8.507059e+37
        %v1328 = vand.u32 %v1103, 2147483648
        %v1329 = vor.u32 1.1754944e-38, %v1328
        %v1330 = vsel %vm1327, %v1329, %v1325
        %v1331 = vmul.f32 1.0, %v1330
        %v1332 = vrcp.pop %v1104
        %v1333 = vmul.f32 %v1104, %v1332
        %v1334 = vsub.f32 1.0, %v1333
        %v1335 = vmul.f32 %v1332, %v1334
        %v1336 = vadd.f32 %v1332, %v1335
        %vm1337 = vweird.f32 %v1104
        %vm1338 = vweird.f32 %v1332
        %vm1339 = vmor %vm1337, %vm1338
        %v1340 = vsel %vm1339, %v1332, %v1336
        %v1341 = vand.u32 2147483647, %v1104
        %vm1342 = vcmp.eq.f32.partialorder %v1341, 8.507059e+37
        %v1343 = vand.u32 %v1104, 2147483648
        %v1344 = vor.u32 1.1754944e-38, %v1343
        %v1345 = vsel %vm1342, %v1344, %v1340
        %v1346 = vmul.f32 1.0, %v1345
        %v1347 = vrcp.pop %v1105
        %v1348 = vmul.f32 %v1105, %v1347
        %v1349 = vsub.f32 1.0, %v1348
        %v1350 = vmul.f32 %v1347, %v1349
        %v1351 = vadd.f32 %v1347, %v1350
        %vm1352 = vweird.f32 %v1105
        %vm1353 = vweird.f32 %v1347
        %vm1354 = vmor %vm1352, %vm1353
        %v1355 = vsel %vm1354, %v1347, %v1351
        %v1356 = vand.u32 2147483647, %v1105
        %vm1357 = vcmp.eq.f32.partialorder %v1356, 8.507059e+37
        %v1358 = vand.u32 %v1105, 2147483648
        %v1359 = vor.u32 1.1754944e-38, %v1358
        %v1360 = vsel %vm1357, %v1359, %v1355
        %v1361 = vmul.f32 1.0, %v1360
        %v1362 = vrcp.pop %v1106
        %v1363 = vmul.f32 %v1106, %v1362
        %v1364 = vsub.f32 1.0, %v1363
        %v1365 = vmul.f32 %v1362, %v1364
        %v1366 = vadd.f32 %v1362, %v1365
        %vm1367 = vweird.f32 %v1106
        %vm1368 = vweird.f32 %v1362
        %vm1369 = vmor %vm1367, %vm1368
        %v1370 = vsel %vm1369, %v1362, %v1366
        %v1371 = vand.u32 2147483647, %v1106
        %vm1372 = vcmp.eq.f32.partialorder %v1371, 8.507059e+37
        %v1373 = vand.u32 %v1106, 2147483648
        %v1374 = vor.u32 1.1754944e-38, %v1373
        %v1375 = vsel %vm1372, %v1374, %v1370
        %v1376 = vmul.f32 1.0, %v1375
        %v1377 = vrcp.pop %v1107
        %v1378 = vmul.f32 %v1107, %v1377
        %v1379 = vsub.f32 1.0, %v1378
        %v1380 = vmul.f32 %v1377, %v1379
        %v1381 = vadd.f32 %v1377, %v1380
        %vm1382 = vweird.f32 %v1107
        %vm1383 = vweird.f32 %v1377
        %vm1384 = vmor %vm1382, %vm1383
        %v1385 = vsel %vm1384, %v1377, %v1381
        %v1386 = vand.u32 2147483647, %v1107
        %vm1387 = vcmp.eq.f32.partialorder %v1386, 8.507059e+37
        %v1388 = vand.u32 %v1107, 2147483648
        %v1389 = vor.u32 1.1754944e-38, %v1388
        %v1390 = vsel %vm1387, %v1389, %v1385
        %v1391 = vmul.f32 1.0, %v1390
        %v1392 = vrcp.pop %v1108
        %v1393 = vmul.f32 %v1108, %v1392
        %v1394 = vsub.f32 1.0, %v1393
        %v1395 = vmul.f32 %v1392, %v1394
        %v1396 = vadd.f32 %v1392, %v1395
        %vm1397 = vweird.f32 %v1108
        %vm1398 = vweird.f32 %v1392
        %vm1399 = vmor %vm1397, %vm1398
        %v1400 = vsel %vm1399, %v1392, %v1396
        %v1401 = vand.u32 2147483647, %v1108
        %vm1402 = vcmp.eq.f32.partialorder %v1401, 8.507059e+37
        %v1403 = vand.u32 %v1108, 2147483648
        %v1404 = vor.u32 1.1754944e-38, %v1403
        %v1405 = vsel %vm1402, %v1404, %v1400
        %v1406 = vmul.f32 1.0, %v1405
        %v1407 = vrcp.pop %v1109
        %v1408 = vmul.f32 %v1109, %v1407
        %v1409 = vsub.f32 1.0, %v1408
        %v1410 = vmul.f32 %v1407, %v1409
        %v1411 = vadd.f32 %v1407, %v1410
        %vm1412 = vweird.f32 %v1109
        %vm1413 = vweird.f32 %v1407
        %vm1414 = vmor %vm1412, %vm1413
        %v1415 = vsel %vm1414, %v1407, %v1411
        %v1416 = vand.u32 2147483647, %v1109
        %vm1417 = vcmp.eq.f32.partialorder %v1416, 8.507059e+37
        %v1418 = vand.u32 %v1109, 2147483648
        %v1419 = vor.u32 1.1754944e-38, %v1418
        %v1420 = vsel %vm1417, %v1419, %v1415
        %v1421 = vmul.f32 1.0, %v1420
        %v1422 = vrcp.pop %v1110
        %v1423 = vmul.f32 %v1110, %v1422
        %v1424 = vsub.f32 1.0, %v1423
        %v1425 = vmul.f32 %v1422, %v1424
        %v1426 = vadd.f32 %v1422, %v1425
        %vm1427 = vweird.f32 %v1110
        %vm1428 = vweird.f32 %v1422
        %vm1429 = vmor %vm1427, %vm1428
        %v1430 = vsel %vm1429, %v1422, %v1426
        %v1431 = vand.u32 2147483647, %v1110
        %vm1432 = vcmp.eq.f32.partialorder %v1431, 8.507059e+37
        %v1433 = vand.u32 %v1110, 2147483648
        %v1434 = vor.u32 1.1754944e-38, %v1433
        %v1435 = vsel %vm1432, %v1434, %v1430
        %v1436 = vmul.f32 1.0, %v1435
        %v1437 = vrcp.pop %v1111
        %v1438 = vmul.f32 %v1111, %v1437
        %v1439 = vsub.f32 1.0, %v1438
        %v1440 = vmul.f32 %v1437, %v1439
        %v1441 = vadd.f32 %v1437, %v1440
        %vm1442 = vweird.f32 %v1111
        %vm1443 = vweird.f32 %v1437
        %vm1444 = vmor %vm1442, %vm1443
        %v1445 = vsel %vm1444, %v1437, %v1441
        %v1446 = vand.u32 2147483647, %v1111
        %vm1447 = vcmp.eq.f32.partialorder %v1446, 8.507059e+37
        %v1448 = vand.u32 %v1111, 2147483648
        %v1449 = vor.u32 1.1754944e-38, %v1448
        %v1450 = vsel %vm1447, %v1449, %v1445
        %v1451 = vmul.f32 1.0, %v1450
        %v1452 = vrcp.pop %v1112
        %v1453 = vmul.f32 %v1112, %v1452
        %v1454 = vsub.f32 1.0, %v1453
        %v1455 = vmul.f32 %v1452, %v1454
        %v1456 = vadd.f32 %v1452, %v1455
        %vm1457 = vweird.f32 %v1112
        %vm1458 = vweird.f32 %v1452
        %vm1459 = vmor %vm1457, %vm1458
        %v1460 = vsel %vm1459, %v1452, %v1456
        %v1461 = vand.u32 2147483647, %v1112
        %vm1462 = vcmp.eq.f32.partialorder %v1461, 8.507059e+37
        %v1463 = vand.u32 %v1112, 2147483648
        %v1464 = vor.u32 1.1754944e-38, %v1463
        %v1465 = vsel %vm1462, %v1464, %v1460
        %v1466 = vmul.f32 1.0, %v1465
        %v1467 = vrcp.pop %v1113
        %v1468 = vmul.f32 %v1113, %v1467
        %v1469 = vsub.f32 1.0, %v1468
        %v1470 = vmul.f32 %v1467, %v1469
        %v1471 = vadd.f32 %v1467, %v1470
        %vm1472 = vweird.f32 %v1113
        %vm1473 = vweird.f32 %v1467
        %vm1474 = vmor %vm1472, %vm1473
        %v1475 = vsel %vm1474, %v1467, %v1471
        %v1476 = vand.u32 2147483647, %v1113
        %vm1477 = vcmp.eq.f32.partialorder %v1476, 8.507059e+37
        %v1478 = vand.u32 %v1113, 2147483648
        %v1479 = vor.u32 1.1754944e-38, %v1478
        %v1480 = vsel %vm1477, %v1479, %v1475
        %v1481 = vmul.f32 1.0, %v1480
        %v1482 = vrcp.pop %v1114
        %v1483 = vmul.f32 %v1114, %v1482
        %v1484 = vsub.f32 1.0, %v1483
        %v1485 = vmul.f32 %v1482, %v1484
        %v1486 = vadd.f32 %v1482, %v1485
        %vm1487 = vweird.f32 %v1114
        %vm1488 = vweird.f32 %v1482
        %vm1489 = vmor %vm1487, %vm1488
        %v1490 = vsel %vm1489, %v1482, %v1486
        %v1491 = vand.u32 2147483647, %v1114
        %vm1492 = vcmp.eq.f32.partialorder %v1491, 8.507059e+37
        %v1493 = vand.u32 %v1114, 2147483648
        %v1494 = vor.u32 1.1754944e-38, %v1493
        %v1495 = vsel %vm1492, %v1494, %v1490
        %v1496 = vmul.f32 1.0, %v1495
        %v1497 = vrcp.pop %v1115
        %v1498 = vmul.f32 %v1115, %v1497
        %v1499 = vsub.f32 1.0, %v1498
        %v1500 = vmul.f32 %v1497, %v1499
        %v1501 = vadd.f32 %v1497, %v1500
        %vm1502 = vweird.f32 %v1115
        %vm1503 = vweird.f32 %v1497
        %vm1504 = vmor %vm1502, %vm1503
        %v1505 = vsel %vm1504, %v1497, %v1501
        %v1506 = vand.u32 2147483647, %v1115
        %vm1507 = vcmp.eq.f32.partialorder %v1506, 8.507059e+37
        %v1508 = vand.u32 %v1115, 2147483648
        %v1509 = vor.u32 1.1754944e-38, %v1508
        %v1510 = vsel %vm1507, %v1509, %v1505
        %v1511 = vmul.f32 1.0, %v1510
        %v1512 = vrcp.pop %v1116
        %v1513 = vmul.f32 %v1116, %v1512
        %v1514 = vsub.f32 1.0, %v1513
        %v1515 = vmul.f32 %v1512, %v1514
        %v1516 = vadd.f32 %v1512, %v1515
        %vm1517 = vweird.f32 %v1116
        %vm1518 = vweird.f32 %v1512
        %vm1519 = vmor %vm1517, %vm1518
        %v1520 = vsel %vm1519, %v1512, %v1516
        %v1521 = vand.u32 2147483647, %v1116
        %vm1522 = vcmp.eq.f32.partialorder %v1521, 8.507059e+37
        %v1523 = vand.u32 %v1116, 2147483648
        %v1524 = vor.u32 1.1754944e-38, %v1523
        %v1525 = vsel %vm1522, %v1524, %v1520
        %v1526 = vmul.f32 1.0, %v1525
        %v1527 = vrcp.pop %v1117
        %v1528 = vmul.f32 %v1117, %v1527
        %v1529 = vsub.f32 1.0, %v1528
        %v1530 = vmul.f32 %v1527, %v1529
        %v1531 = vadd.f32 %v1527, %v1530
        %vm1532 = vweird.f32 %v1117
        %vm1533 = vweird.f32 %v1527
        %vm1534 = vmor %vm1532, %vm1533
        %v1535 = vsel %vm1534, %v1527, %v1531
        %v1536 = vand.u32 2147483647, %v1117
        %vm1537 = vcmp.eq.f32.partialorder %v1536, 8.507059e+37
        %v1538 = vand.u32 %v1117, 2147483648
        %v1539 = vor.u32 1.1754944e-38, %v1538
        %v1540 = vsel %vm1537, %v1539, %v1535
        %v1541 = vmul.f32 1.0, %v1540
        %v1542 = vrcp.pop %v1118
        %v1543 = vmul.f32 %v1118, %v1542
        %v1544 = vsub.f32 1.0, %v1543
        %v1545 = vmul.f32 %v1542, %v1544
        %v1546 = vadd.f32 %v1542, %v1545
        %vm1547 = vweird.f32 %v1118
        %vm1548 = vweird.f32 %v1542
        %vm1549 = vmor %vm1547, %vm1548
        %v1550 = vsel %vm1549, %v1542, %v1546
        %v1551 = vand.u32 2147483647, %v1118
        %vm1552 = vcmp.eq.f32.partialorder %v1551, 8.507059e+37
        %v1553 = vand.u32 %v1118, 2147483648
        %v1554 = vor.u32 1.1754944e-38, %v1553
        %v1555 = vsel %vm1552, %v1554, %v1550
        %v1556 = vmul.f32 1.0, %v1555
        %v1557 = vrcp.pop %v1119
        %v1558 = vmul.f32 %v1119, %v1557
        %v1559 = vsub.f32 1.0, %v1558
        %v1560 = vmul.f32 %v1557, %v1559
        %v1561 = vadd.f32 %v1557, %v1560
        %vm1562 = vweird.f32 %v1119
        %vm1563 = vweird.f32 %v1557
        %vm1564 = vmor %vm1562, %vm1563
        %v1565 = vsel %vm1564, %v1557, %v1561
        %v1566 = vand.u32 2147483647, %v1119
        %vm1567 = vcmp.eq.f32.partialorder %v1566, 8.507059e+37
        %v1568 = vand.u32 %v1119, 2147483648
        %v1569 = vor.u32 1.1754944e-38, %v1568
        %v1570 = vsel %vm1567, %v1569, %v1565
        %v1571 = vmul.f32 1.0, %v1570
        %v1572 = vrcp.pop %v1120
        %v1573 = vmul.f32 %v1120, %v1572
        %v1574 = vsub.f32 1.0, %v1573
        %v1575 = vmul.f32 %v1572, %v1574
        %v1576 = vadd.f32 %v1572, %v1575
        %vm1577 = vweird.f32 %v1120
        %vm1578 = vweird.f32 %v1572
        %vm1579 = vmor %vm1577, %vm1578
        %v1580 = vsel %vm1579, %v1572, %v1576
        %v1581 = vand.u32 2147483647, %v1120
        %vm1582 = vcmp.eq.f32.partialorder %v1581, 8.507059e+37
        %v1583 = vand.u32 %v1120, 2147483648
        %v1584 = vor.u32 1.1754944e-38, %v1583
        %v1585 = vsel %vm1582, %v1584, %v1580
        %v1586 = vmul.f32 1.0, %v1585
        %v1587 = vrcp.pop %v1121
        %v1588 = vmul.f32 %v1121, %v1587
        %v1589 = vsub.f32 1.0, %v1588
        %v1590 = vmul.f32 %v1587, %v1589
        %v1591 = vadd.f32 %v1587, %v1590
        %vm1592 = vweird.f32 %v1121
        %vm1593 = vweird.f32 %v1587
        %vm1594 = vmor %vm1592, %vm1593
        %v1595 = vsel %vm1594, %v1587, %v1591
        %v1596 = vand.u32 2147483647, %v1121
        %vm1597 = vcmp.eq.f32.partialorder %v1596, 8.507059e+37
        %v1598 = vand.u32 %v1121, 2147483648
        %v1599 = vor.u32 1.1754944e-38, %v1598
        %v1600 = vsel %vm1597, %v1599, %v1595
        %v1601 = vmul.f32 1.0, %v1600
        %v1602 = vmul.f32 %v962, %v1136
        %v1603 = vmul.f32 %v963, %v1151
        %v1604 = vmul.f32 %v964, %v1166
        %v1605 = vmul.f32 %v965, %v1181
        %v1606 = vmul.f32 %v966, %v1196
        %v1607 = vmul.f32 %v967, %v1211
        %v1608 = vmul.f32 %v968, %v1226
        %v1609 = vmul.f32 %v969, %v1241
        %v1610 = vmul.f32 %v970, %v1256
        %v1611 = vmul.f32 %v971, %v1271
        %v1612 = vmul.f32 %v972, %v1286
        %v1613 = vmul.f32 %v973, %v1301
        %v1614 = vmul.f32 %v974, %v1316
        %v1615 = vmul.f32 %v975, %v1331
        %v1616 = vmul.f32 %v976, %v1346
        %v1617 = vmul.f32 %v977, %v1361
        %v1618 = vmul.f32 %v978, %v1376
        %v1619 = vmul.f32 %v979, %v1391
        %v1620 = vmul.f32 %v980, %v1406
        %v1621 = vmul.f32 %v981, %v1421
        %v1622 = vmul.f32 %v982, %v1436
        %v1623 = vmul.f32 %v983, %v1451
        %v1624 = vmul.f32 %v984, %v1466
        %v1625 = vmul.f32 %v985, %v1481
        %v1626 = vmul.f32 %v986, %v1496
        %v1627 = vmul.f32 %v987, %v1511
        %v1628 = vmul.f32 %v988, %v1526
        %v1629 = vmul.f32 %v989, %v1541
        %v1630 = vmul.f32 %v990, %v1556
        %v1631 = vmul.f32 %v991, %v1571
        %v1632 = vmul.f32 %v992, %v1586
        %v1633 = vmul.f32 %v993, %v1601
        %1634 = vst [vmem:[%s191] sm:$0xff] %v1602
        %1635 = vst [vmem:[%s191 + $0x8] sm:$0xff] %v1603
        %1636 = vst [vmem:[%s191 + $0x10] sm:$0xff] %v1604
        %1637 = vst [vmem:[%s191 + $0x18] sm:$0xff] %v1605
        %1638 = vst [vmem:[%s191 + $0x20] sm:$0xff] %v1606
        %1639 = vst [vmem:[%s191 + $0x28] sm:$0xff] %v1607
        %1640 = vst [vmem:[%s191 + $0x30] sm:$0xff] %v1608
        %1641 = vst [vmem:[%s191 + $0x38] sm:$0xff] %v1609
        %1642 = vst [vmem:[%s191 + $0x40] sm:$0xff] %v1610
        %1643 = vst [vmem:[%s191 + $0x48] sm:$0xff] %v1611
        %1644 = vst [vmem:[%s191 + $0x50] sm:$0xff] %v1612
        %1645 = vst [vmem:[%s191 + $0x58] sm:$0xff] %v1613
        %1646 = vst [vmem:[%s191 + $0x60] sm:$0xff] %v1614
        %1647 = vst [vmem:[%s191 + $0x68] sm:$0xff] %v1615
        %1648 = vst [vmem:[%s191 + $0x70] sm:$0xff] %v1616
        %1649 = vst [vmem:[%s191 + $0x78] sm:$0xff] %v1617
        %1650 = vst [vmem:[%s191 + $0x80] sm:$0xff] %v1618
        %1651 = vst [vmem:[%s191 + $0x88] sm:$0xff] %v1619
        %1652 = vst [vmem:[%s191 + $0x90] sm:$0xff] %v1620
        %1653 = vst [vmem:[%s191 + $0x98] sm:$0xff] %v1621
        %1654 = vst [vmem:[%s191 + $0xa0] sm:$0xff] %v1622
        %1655 = vst [vmem:[%s191 + $0xa8] sm:$0xff] %v1623
        %1656 = vst [vmem:[%s191 + $0xb0] sm:$0xff] %v1624
        %1657 = vst [vmem:[%s191 + $0xb8] sm:$0xff] %v1625
        %1658 = vst [vmem:[%s191 + $0xc0] sm:$0xff] %v1626
        %1659 = vst [vmem:[%s191 + $0xc8] sm:$0xff] %v1627
        %1660 = vst [vmem:[%s191 + $0xd0] sm:$0xff] %v1628
        %1661 = vst [vmem:[%s191 + $0xd8] sm:$0xff] %v1629
        %1662 = vst [vmem:[%s191 + $0xe0] sm:$0xff] %v1630
        %1663 = vst [vmem:[%s191 + $0xe8] sm:$0xff] %v1631
        %1664 = vst [vmem:[%s191 + $0xf0] sm:$0xff] %v1632
        %1665 = vst [vmem:[%s191 + $0xf8] sm:$0xff] %v1633
        %s1666 = sand.u32 %s115, 1
        %s1667 = scalar_lea.sflag [#allocation3], %s1666
        %s1668 = sand.u32 %s115, 1
        %s1669 = smul.addr %s1668, 256
        %s1670 = scalar_lea.vmem [#allocation2], %s1669
        // Predicated region
        $region37: #{tpu_custom_call.1} parent=35 // pred_check
          %p1671 = pneg %p125
        $region38: #{tpu_custom_call.1} parent=35 // pred_check_branch
          %1673 = sbr.rel (%p1671) target = $region40
        $region39: #{tpu_custom_call.1} parent=35 // pred_region
          %s1674 = smul.u32 32, %s18
          %1676 = vsyncadd %s1667, 0
          %s1677 = smul.addr %s1674, 8
          %s1678 = scalar_lea.hbm %s4, %s1677
          %s1679 = sshll.u32 %s1670, 4
          %s1680 = int_to_ptr.vmem [resolvable:$true] %s1679
          %s1681 = sshll.u32 %s1678, 4
          %s1682 = int_to_ptr.hbm [resolvable:$true] %s1681
          %1687 = dma.vmem_to_hbm [thread:$0]  %s1680, 4096, %s1682, %s1667, 128, 128, 8
        $region40: #{tpu_custom_call.1} parent=35 // pred_fallthru
          _
      $region36: #{tpu_custom_call.1} parent=5 // pred_fallthru
        _
      %p1688 = scmp.le.s32.totalorder 2, %s13
      // Predicated region
      $region41: #{tpu_custom_call.1} parent=5 // pred_check
        %p1689 = pneg %p1688
      $region42: #{tpu_custom_call.1} parent=5 // pred_check_branch
        %1691 = sbr.rel (%p1689) target = $region44
      $region43: #{tpu_custom_call.1} parent=5 // pred_region
        %s1692 = ssub.s32 %s13, 2
        // Predicated region
        $region45: #{tpu_custom_call.1} parent=43 // pred_check
          %p1693 = pneg %p131
        $region46: #{tpu_custom_call.1} parent=43 // pred_check_branch
          %1695 = sbr.rel (%p1693) target = $region48
        $region47: #{tpu_custom_call.1} parent=43 // pred_region
          %s1696 = sand.u32 %s116, 1
          %s1697 = scalar_lea.sflag [#allocation3], %s1696
          %s1698 = sand.u32 %s116, 1
          %s1699 = smul.addr %s1698, 256
          %s1700 = scalar_lea.vmem [#allocation2], %s1699
          %1702 = dma.done %s1697, 4096
        $region48: #{tpu_custom_call.1} parent=43 // pred_fallthru
          _
      $region44: #{tpu_custom_call.1} parent=5 // pred_fallthru
        _
    $region6: #{tpu_custom_call.1} parent=1 // loop_footer
      %s17 = sadd.s32 1, %s13
    $region7: #{tpu_custom_call.1} parent=1 // loop_footer_branch
      %12 = sbr.rel target = $region3
    $region8: #{tpu_custom_call.1} parent=1 // loop_exit
      _
    %1703 = vsyncpa [#allocation3], 1
    %s1704 = scalar_lea.sflag [#allocation3], 1
    %1705 = vsyncpa %s1704, 1

</llo_original>
